<compile_context>
chip_gen: v7x
topology: tpu7x:2x2x1
jax: 0.10.0
libtpu: 0.0.40
codegen_flags: <defaults>
</compile_context>

<pallas_src>
import functools

import jax
import jax.numpy as jnp
from jax import lax
from jax.experimental import pallas as pl
from jax.experimental.pallas import tpu as pltpu


def _round_up(x, m):
    return ((x + m - 1) // m) * m


def _rnn_kernel(x_ref, wih_ref, whh_ref, bias_ref, o_ref, h_scratch, *,
                n_sub, unroll):
    """One grid step = tc timesteps of the recurrence for one batch chunk.

    x_ref:     (tc, bc, d_pad)   time-major input block (mxu dtype)
    wih_ref:   (d_pad, h_pad)    W_ih^T, resident (mxu dtype)
    whh_ref:   (h_pad, h_pad)    W_hh^T, resident (mxu dtype)
    bias_ref:  (1, h_pad)        b_ih + b_hh (f32)
    o_ref:     (tc, bc, h_pad)   time-major outputs, time-reversed in-chunk (f32)
    h_scratch: (bc, h_pad)       f32 hidden-state carry across time chunks
    """
    # New batch chunk's time sweep -> reset the hidden state.
    @pl.when(pl.program_id(1) == 0)
    def _():
        h_scratch[...] = jnp.zeros_like(h_scratch)

    tc, bc, _ = x_ref.shape
    sub = bc // n_sub

    w_ih = wih_ref[...]
    w_hh = whh_ref[...]
    bias = bias_ref[...]              # (1, h_pad) f32, broadcasts
    mxu_dt = w_hh.dtype

    # Independent batch sub-chains (interleaved to hide MXU latency).
    hs0 = tuple(h_scratch[s * sub:(s + 1) * sub, :] for s in range(n_sub))

    def group(g, hs):
        hs = list(hs)
        base = pl.multiple_of(g * unroll, unroll)
        for u in range(unroll):
            t = base + u
            # Input projection: independent of the h chain -> free filler on
            # the latency-bound recurrence. f32 accumulation.
            p_t = jnp.dot(x_ref[t], w_ih,
                          preferred_element_type=jnp.float32) + bias
            row = tc - 1 - t          # fused reverse_sequence within the chunk
            for s in range(n_sub):
                pre = jnp.dot(hs[s].astype(mxu_dt), w_hh,
                              preferred_element_type=jnp.float32)
                pre = pre + p_t[s * sub:(s + 1) * sub, :]
                hs[s] = jnp.maximum(pre, 0.0)          # nonlin='relu'
                # Dense, lane-aligned (sub, h_pad) slab store (no sublane scatter).
                o_ref[row, s * sub:(s + 1) * sub, :] = hs[s].astype(o_ref.dtype)
        return tuple(hs)

    hs = lax.fori_loop(0, tc // unroll, group, hs0)

    for s in range(n_sub):
        h_scratch[s * sub:(s + 1) * sub, :] = hs[s]


def rnn_encoder_forward(x, w_ih, w_hh, b_ih, b_hh, *,
                        time_chunk=64, batch_chunk=128,
                        mxu_dtype=jnp.bfloat16):
    """x: (B, T, D) f32 -> (B, T, H) f32, time-reversed (reverse_input=True).

    mxu_dtype=jnp.bfloat16 runs MXU operands at bf16 rate (f32 accumulation and
    f32 hidden-state carry); pass jnp.float32 for an exact-semantics path.
    """
    B, T, D = x.shape
    H = w_ih.shape[0]

    h_pad = _round_up(H, 128)       # lanes
    d_pad = _round_up(D, 8)

    # Batch chunk: multiple of 8 sublanes; ensure nb >= 2 when possible so the
    # "parallel" batch axis actually splits across v7x's two TensorCores.
    b8 = _round_up(B, 8)
    bc = min(b8, _round_up(batch_chunk, 8))
    if b8 >= 16 and b8 // bc < 2:
        bc = _round_up((b8 + 1) // 2, 8)
    b_pad = _round_up(b8, bc)
    nb = b_pad // bc

    # Time chunk: multiple of 8; cap so the f32 output block stays <= ~6 MiB
    # (double-buffered in/out streams + resident weights fit v7x's 32 MiB
    # default scoped VMEM and comfortably fit v5e/v6e).
    tc = min(_round_up(T, 8), _round_up(time_chunk, 8))
    max_tc = max(8, ((6 << 20) // (bc * h_pad * 4)) // 8 * 8)
    tc = min(tc, max_tc)
    t_pad = _round_up(T, tc)
    nt = t_pad // tc

    unroll = 8
    n_sub = 2 if (bc % 16 == 0) else 1

    # Zero-padded parameters / inputs. Padded rows/cols/lanes contribute
    # nothing to real lanes; padded timesteps come after the real ones and are
    # stripped from the output.
    wih_t = jnp.pad(w_ih.T.astype(jnp.float32),
                    ((0, d_pad - D), (0, h_pad - H))).astype(mxu_dtype)
    whh_t = jnp.pad(w_hh.T.astype(jnp.float32),
                    ((0, h_pad - H), (0, h_pad - H))).astype(mxu_dtype)
    bias = jnp.pad((b_ih + b_hh).astype(jnp.float32),
                   (0, h_pad - H)).reshape(1, h_pad)
    x_tm = jnp.transpose(x.astype(jnp.float32), (1, 0, 2))      # time-major
    x_p = jnp.pad(x_tm, ((0, t_pad - T), (0, b_pad - B),
                         (0, d_pad - D))).astype(mxu_dtype)

    itm = jnp.dtype(mxu_dtype).itemsize
    flops = 2 * b_pad * t_pad * h_pad * (d_pad + h_pad)
    bytes_accessed = (t_pad * b_pad * d_pad * itm            # x read
                      + t_pad * b_pad * h_pad * 4            # out write
                      + (d_pad * h_pad + h_pad * h_pad) * itm
                      + h_pad * 4)
    vmem_need = (2 * tc * bc * d_pad * itm                    # x blocks (dbl-buf)
                 + 2 * tc * bc * h_pad * 4                    # out blocks (dbl-buf)
                 + 2 * (d_pad * h_pad + h_pad * h_pad) * itm  # resident weights
                 + 2 * h_pad * 4                              # bias
                 + bc * h_pad * 4)                            # carry scratch
    vmem_limit = int(min(max(2 * vmem_need + (8 << 20), 32 << 20), 112 << 20))

    kernel = functools.partial(_rnn_kernel, n_sub=n_sub, unroll=unroll)

    out_full = pl.pallas_call(
        kernel,
        out_shape=jax.ShapeDtypeStruct((t_pad, b_pad, h_pad), jnp.float32),
        grid_spec=pltpu.PrefetchScalarGridSpec(
            num_scalar_prefetch=0,
            grid=(nb, nt),
            in_specs=[
                # Time-major input block.
                pl.BlockSpec((tc, bc, d_pad), lambda b, c: (c, b, 0)),
                # Resident weights / bias (constant index_map).
                pl.BlockSpec((d_pad, h_pad), lambda b, c: (0, 0)),
                pl.BlockSpec((h_pad, h_pad), lambda b, c: (0, 0)),
                pl.BlockSpec((1, h_pad), lambda b, c: (0, 0)),
            ],
            # Time-major, lane-dense output; chunk-level reversal fused here.
            out_specs=pl.BlockSpec((tc, bc, h_pad),
                                   lambda b, c: (nt - 1 - c, b, 0)),
            scratch_shapes=[pltpu.VMEM((bc, h_pad), jnp.float32)],
        ),
        compiler_params=pltpu.CompilerParams(
            # Batch chunks independent; time recurrence is sequential.
            dimension_semantics=("parallel", "arbitrary"),
            vmem_limit_bytes=vmem_limit,
        ),
        cost_estimate=pl.CostEstimate(flops=flops, transcendentals=0,
                                      bytes_accessed=bytes_accessed),
    )(x_p, wih_t, whh_t, bias)

    # Strip padding (real step t lives at output time index t_pad-1-t, so the
    # result is already time-reversed) and transpose once to (B, T, H).
    out = out_full[t_pad - T:, :B, :H]
    return jnp.transpose(out, (1, 0, 2))


def _reference_forward(x, w_ih, w_hh, b_ih, b_hh):
    """Pure-JAX reference (torch nn.RNN relu + reverse_sequence, full lengths)."""
    B, T, D = x.shape
    H = w_ih.shape[0]
    x_tm = jnp.transpose(x, (1, 0, 2))

    def step(h, x_t):
        pre = (jnp.dot(x_t, w_ih.T, precision=lax.Precision.HIGHEST)
               + b_ih
               + jnp.dot(h, w_hh.T, precision=lax.Precision.HIGHEST)
               + b_hh)
        h_new = jnp.maximum(pre, 0.0)
        return h_new, h_new

    _, hs = lax.scan(step, jnp.zeros((B, H), jnp.float32), x_tm)
    h_rnn = jnp.transpose(hs, (1, 0, 2))            # (B, T, H)
    return h_rnn[:, ::-1, :]                        # reverse_input=True


if __name__ == "__main__":
    B, T, D, H = 2, 8, 16, 32

    key = jax.random.PRNGKey(0)
    k_x, k_wih, k_whh, k_bih, k_bhh = jax.random.split(key, 5)

    scale = 1.0 / jnp.sqrt(H)
    x = jax.random.normal(k_x, (B, T, D), dtype=jnp.float32)
    w_ih = jax.random.uniform(k_wih, (H, D), minval=-scale, maxval=scale, dtype=jnp.float32)
    w_hh = jax.random.uniform(k_whh, (H, H), minval=-scale, maxval=scale, dtype=jnp.float32)
    b_ih = jax.random.uniform(k_bih, (H,), minval=-scale, maxval=scale, dtype=jnp.float32)
    b_hh = jax.random.uniform(k_bhh, (H,), minval=-scale, maxval=scale, dtype=jnp.float32)

    ref = _reference_forward(x, w_ih, w_hh, b_ih, b_hh)

    # Exact-semantics path (f32 MXU operands).
    fwd_f32 = jax.jit(functools.partial(rnn_encoder_forward, mxu_dtype=jnp.float32))
    out_f32 = jax.block_until_ready(fwd_f32(x, w_ih, w_hh, b_ih, b_hh))
    assert out_f32.shape == (B, T, H)
    assert jnp.allclose(out_f32, ref, atol=1e-3, rtol=1e-3), \
        float(jnp.max(jnp.abs(out_f32 - ref)))

    # Default fast path (bf16 MXU operands, f32 accumulation / f32 h carry).
    fwd = jax.jit(rnn_encoder_forward)
    out = jax.block_until_ready(fwd(x, w_ih, w_hh, b_ih, b_hh))
    assert out.shape == (B, T, H)
    assert jnp.allclose(out, ref, atol=3e-2, rtol=3e-2), \
        float(jnp.max(jnp.abs(out - ref)))

    print("KERNEL_OK")
</pallas_src>

<mosaic_0001>
module attributes {stable_mosaic.version = 11 : i64} {
  func.func @_rnn_kernel(%arg0: i32, %arg1: i32, %arg2: memref<8x8x16xf32, #tpu.memory_space<vmem>>, %arg3: memref<16x128xf32, #tpu.memory_space<vmem>>, %arg4: memref<128x128xf32, #tpu.memory_space<vmem>>, %arg5: memref<1x128xf32, #tpu.memory_space<vmem>>, %arg6: memref<8x8x128xf32, #tpu.memory_space<vmem>>, %arg7: memref<8x128xf32, #tpu.memory_space<vmem>>) attributes {dimension_semantics = [#tpu.dimension_semantics<parallel>, #tpu.dimension_semantics<arbitrary>], iteration_bounds = array<i64: 1, 1>, scalar_prefetch = 0 : i64, scratch_operands = 1 : i64, tpu.core_type = #tpu.core_type<tc>, window_params = [{transform_indices = @transform_0, window_bounds = array<i64: 8, 8, 16>}, {pipeline_mode = #tpu.pipeline_mode<synchronous>, transform_indices = @transform_1, window_bounds = array<i64: 16, 128>}, {pipeline_mode = #tpu.pipeline_mode<synchronous>, transform_indices = @transform_2, window_bounds = array<i64: 128, 128>}, {pipeline_mode = #tpu.pipeline_mode<synchronous>, transform_indices = @transform_3, window_bounds = array<i64: 1, 128>}, {transform_indices = @transform_4, window_bounds = array<i64: 8, 8, 128>}]} {
    %c0_i32 = arith.constant 0 : i32
    %0 = arith.cmpi eq, %arg1, %c0_i32 : i32
    %1 = arith.extui %0 : i1 to i32
    %c0_i32_0 = arith.constant 0 : i32
    %2 = arith.cmpi ne, %1, %c0_i32_0 : i32
    scf.if %2 {
      %cst_76 = arith.constant 0.000000e+00 : f32
      %138 = vector.broadcast %cst_76 : f32 to vector<8x128xf32>
      %c0_77 = arith.constant 0 : index
      %c0_78 = arith.constant 0 : index
      %139 = vector.load %arg7[%c0_77, %c0_78] : memref<8x128xf32, #tpu.memory_space<vmem>>, vector<8x128xf32>
      tpu.vector_store %arg7[%c0_77, %c0_78], %138 {strides = array<i32>} : memref<8x128xf32, #tpu.memory_space<vmem>>, vector<8x128xf32>,
    } else {
    }
    %c0 = arith.constant 0 : index
    %c0_1 = arith.constant 0 : index
    %3 = vector.load %arg3[%c0, %c0_1] : memref<16x128xf32, #tpu.memory_space<vmem>>, vector<16x128xf32>
    %c0_2 = arith.constant 0 : index
    %c0_3 = arith.constant 0 : index
    %4 = vector.load %arg4[%c0_2, %c0_3] : memref<128x128xf32, #tpu.memory_space<vmem>>, vector<128x128xf32>
    %c0_4 = arith.constant 0 : index
    %c0_5 = arith.constant 0 : index
    %5 = vector.load %arg5[%c0_4, %c0_5] : memref<1x128xf32, #tpu.memory_space<vmem>>, vector<1x128xf32>
    %c0_6 = arith.constant 0 : index
    %c0_7 = arith.constant 0 : index
    %6 = vector.load %arg7[%c0_6, %c0_7] : memref<8x128xf32, #tpu.memory_space<vmem>>, vector<8x128xf32>
    %c0_i32_8 = arith.constant 0 : i32
    %c8_i32 = arith.constant 8 : i32
    %7 = arith.muli %c0_i32_8, %c8_i32 : i32
    %8 = tpu.assume_multiple %7, 8 : i32
    %c0_i32_9 = arith.constant 0 : i32
    %9 = arith.addi %8, %c0_i32_9 : i32
    %10 = arith.index_cast %9 : i32 to index
    %c0_10 = arith.constant 0 : index
    %c0_11 = arith.constant 0 : index
    %11 = vector.load %arg2[%10, %c0_10, %c0_11] : memref<8x8x16xf32, #tpu.memory_space<vmem>>, vector<1x8x16xf32>
    %12 = vector.shape_cast %11 : vector<1x8x16xf32> to vector<8x16xf32>
    %cst = arith.constant dense<0.000000e+00> : vector<8x128xf32>
    %13 = tpu.matmul %12, %3, %cst {dimension_numbers = #tpu.dot_dimension_numbers<[1], [0], [0], [1], [0, 0, 1, 1], [], []>} : vector<8x16xf32>, vector<16x128xf32>, vector<8x128xf32> -> vector<8x128xf32>
    %14 = vector.broadcast %5 : vector<1x128xf32> to vector<8x128xf32>
    %15 = arith.addf %13, %14 : vector<8x128xf32>
    %c7_i32 = arith.constant 7 : i32
    %16 = arith.subi %c7_i32, %9 : i32
    %cst_12 = arith.constant dense<0.000000e+00> : vector<8x128xf32>
    %17 = tpu.matmul %6, %4, %cst_12 {dimension_numbers = #tpu.dot_dimension_numbers<[1], [0], [0], [1], [0, 0, 1, 1], [], []>} : vector<8x128xf32>, vector<128x128xf32>, vector<8x128xf32> -> vector<8x128xf32>
    %18 = arith.addf %17, %15 : vector<8x128xf32>
    %cst_13 = arith.constant 0.000000e+00 : f32
    %19 = vector.broadcast %cst_13 : f32 to vector<8x128xf32>
    %20 = arith.maximumf %18, %19 : vector<8x128xf32>
    %21 = arith.index_cast %16 : i32 to index
    %c0_14 = arith.constant 0 : index
    %c0_15 = arith.constant 0 : index
    %22 = vector.load %arg6[%21, %c0_14, %c0_15] : memref<8x8x128xf32, #tpu.memory_space<vmem>>, vector<1x8x128xf32>
    %23 = vector.shape_cast %22 : vector<1x8x128xf32> to vector<8x128xf32>
    %24 = vector.shape_cast %20 : vector<8x128xf32> to vector<1x8x128xf32>
    tpu.vector_store %arg6[%21, %c0_14, %c0_15], %24 {strides = array<i32>} : memref<8x8x128xf32, #tpu.memory_space<vmem>>, vector<1x8x128xf32>,
    %c1_i32 = arith.constant 1 : i32
    %25 = arith.addi %8, %c1_i32 : i32
    %26 = arith.index_cast %25 : i32 to index
    %c0_16 = arith.constant 0 : index
    %c0_17 = arith.constant 0 : index
    %27 = vector.load %arg2[%26, %c0_16, %c0_17] : memref<8x8x16xf32, #tpu.memory_space<vmem>>, vector<1x8x16xf32>
    %28 = vector.shape_cast %27 : vector<1x8x16xf32> to vector<8x16xf32>
    %cst_18 = arith.constant dense<0.000000e+00> : vector<8x128xf32>
    %29 = tpu.matmul %28, %3, %cst_18 {dimension_numbers = #tpu.dot_dimension_numbers<[1], [0], [0], [1], [0, 0, 1, 1], [], []>} : vector<8x16xf32>, vector<16x128xf32>, vector<8x128xf32> -> vector<8x128xf32>
    %30 = vector.broadcast %5 : vector<1x128xf32> to vector<8x128xf32>
    %31 = arith.addf %29, %30 : vector<8x128xf32>
    %c7_i32_19 = arith.constant 7 : i32
    %32 = arith.subi %c7_i32_19, %25 : i32
    %cst_20 = arith.constant dense<0.000000e+00> : vector<8x128xf32>
    %33 = tpu.matmul %20, %4, %cst_20 {dimension_numbers = #tpu.dot_dimension_numbers<[1], [0], [0], [1], [0, 0, 1, 1], [], []>} : vector<8x128xf32>, vector<128x128xf32>, vector<8x128xf32> -> vector<8x128xf32>
    %34 = arith.addf %33, %31 : vector<8x128xf32>
    %cst_21 = arith.constant 0.000000e+00 : f32
    %35 = vector.broadcast %cst_21 : f32 to vector<8x128xf32>
    %36 = arith.maximumf %34, %35 : vector<8x128xf32>
    %37 = arith.index_cast %32 : i32 to index
    %c0_22 = arith.constant 0 : index
    %c0_23 = arith.constant 0 : index
    %38 = vector.load %arg6[%37, %c0_22, %c0_23] : memref<8x8x128xf32, #tpu.memory_space<vmem>>, vector<1x8x128xf32>
    %39 = vector.shape_cast %38 : vector<1x8x128xf32> to vector<8x128xf32>
    %40 = vector.shape_cast %36 : vector<8x128xf32> to vector<1x8x128xf32>
    tpu.vector_store %arg6[%37, %c0_22, %c0_23], %40 {strides = array<i32>} : memref<8x8x128xf32, #tpu.memory_space<vmem>>, vector<1x8x128xf32>,
    %c2_i32 = arith.constant 2 : i32
    %41 = arith.addi %8, %c2_i32 : i32
    %42 = arith.index_cast %41 : i32 to index
    %c0_24 = arith.constant 0 : index
    %c0_25 = arith.constant 0 : index
    %43 = vector.load %arg2[%42, %c0_24, %c0_25] : memref<8x8x16xf32, #tpu.memory_space<vmem>>, vector<1x8x16xf32>
    %44 = vector.shape_cast %43 : vector<1x8x16xf32> to vector<8x16xf32>
    %cst_26 = arith.constant dense<0.000000e+00> : vector<8x128xf32>
    %45 = tpu.matmul %44, %3, %cst_26 {dimension_numbers = #tpu.dot_dimension_numbers<[1], [0], [0], [1], [0, 0, 1, 1], [], []>} : vector<8x16xf32>, vector<16x128xf32>, vector<8x128xf32> -> vector<8x128xf32>
    %46 = vector.broadcast %5 : vector<1x128xf32> to vector<8x128xf32>
    %47 = arith.addf %45, %46 : vector<8x128xf32>
    %c7_i32_27 = arith.constant 7 : i32
    %48 = arith.subi %c7_i32_27, %41 : i32
    %cst_28 = arith.constant dense<0.000000e+00> : vector<8x128xf32>
    %49 = tpu.matmul %36, %4, %cst_28 {dimension_numbers = #tpu.dot_dimension_numbers<[1], [0], [0], [1], [0, 0, 1, 1], [], []>} : vector<8x128xf32>, vector<128x128xf32>, vector<8x128xf32> -> vector<8x128xf32>
    %50 = arith.addf %49, %47 : vector<8x128xf32>
    %cst_29 = arith.constant 0.000000e+00 : f32
    %51 = vector.broadcast %cst_29 : f32 to vector<8x128xf32>
    %52 = arith.maximumf %50, %51 : vector<8x128xf32>
    %53 = arith.index_cast %48 : i32 to index
    %c0_30 = arith.constant 0 : index
    %c0_31 = arith.constant 0 : index
    %54 = vector.load %arg6[%53, %c0_30, %c0_31] : memref<8x8x128xf32, #tpu.memory_space<vmem>>, vector<1x8x128xf32>
    %55 = vector.shape_cast %54 : vector<1x8x128xf32> to vector<8x128xf32>
    %56 = vector.shape_cast %52 : vector<8x128xf32> to vector<1x8x128xf32>
    tpu.vector_store %arg6[%53, %c0_30, %c0_31], %56 {strides = array<i32>} : memref<8x8x128xf32, #tpu.memory_space<vmem>>, vector<1x8x128xf32>,
    %c3_i32 = arith.constant 3 : i32
    %57 = arith.addi %8, %c3_i32 : i32
    %58 = arith.index_cast %57 : i32 to index
    %c0_32 = arith.constant 0 : index
    %c0_33 = arith.constant 0 : index
    %59 = vector.load %arg2[%58, %c0_32, %c0_33] : memref<8x8x16xf32, #tpu.memory_space<vmem>>, vector<1x8x16xf32>
    %60 = vector.shape_cast %59 : vector<1x8x16xf32> to vector<8x16xf32>
    %cst_34 = arith.constant dense<0.000000e+00> : vector<8x128xf32>
    %61 = tpu.matmul %60, %3, %cst_34 {dimension_numbers = #tpu.dot_dimension_numbers<[1], [0], [0], [1], [0, 0, 1, 1], [], []>} : vector<8x16xf32>, vector<16x128xf32>, vector<8x128xf32> -> vector<8x128xf32>
    %62 = vector.broadcast %5 : vector<1x128xf32> to vector<8x128xf32>
    %63 = arith.addf %61, %62 : vector<8x128xf32>
    %c7_i32_35 = arith.constant 7 : i32
    %64 = arith.subi %c7_i32_35, %57 : i32
    %cst_36 = arith.constant dense<0.000000e+00> : vector<8x128xf32>
    %65 = tpu.matmul %52, %4, %cst_36 {dimension_numbers = #tpu.dot_dimension_numbers<[1], [0], [0], [1], [0, 0, 1, 1], [], []>} : vector<8x128xf32>, vector<128x128xf32>, vector<8x128xf32> -> vector<8x128xf32>
    %66 = arith.addf %65, %63 : vector<8x128xf32>
    %cst_37 = arith.constant 0.000000e+00 : f32
    %67 = vector.broadcast %cst_37 : f32 to vector<8x128xf32>
    %68 = arith.maximumf %66, %67 : vector<8x128xf32>
    %69 = arith.index_cast %64 : i32 to index
    %c0_38 = arith.constant 0 : index
    %c0_39 = arith.constant 0 : index
    %70 = vector.load %arg6[%69, %c0_38, %c0_39] : memref<8x8x128xf32, #tpu.memory_space<vmem>>, vector<1x8x128xf32>
    %71 = vector.shape_cast %70 : vector<1x8x128xf32> to vector<8x128xf32>
    %72 = vector.shape_cast %68 : vector<8x128xf32> to vector<1x8x128xf32>
    tpu.vector_store %arg6[%69, %c0_38, %c0_39], %72 {strides = array<i32>} : memref<8x8x128xf32, #tpu.memory_space<vmem>>, vector<1x8x128xf32>,
    %c4_i32 = arith.constant 4 : i32
    %73 = arith.addi %8, %c4_i32 : i32
    %74 = arith.index_cast %73 : i32 to index
    %c0_40 = arith.constant 0 : index
    %c0_41 = arith.constant 0 : index
    %75 = vector.load %arg2[%74, %c0_40, %c0_41] : memref<8x8x16xf32, #tpu.memory_space<vmem>>, vector<1x8x16xf32>
    %76 = vector.shape_cast %75 : vector<1x8x16xf32> to vector<8x16xf32>
    %cst_42 = arith.constant dense<0.000000e+00> : vector<8x128xf32>
    %77 = tpu.matmul %76, %3, %cst_42 {dimension_numbers = #tpu.dot_dimension_numbers<[1], [0], [0], [1], [0, 0, 1, 1], [], []>} : vector<8x16xf32>, vector<16x128xf32>, vector<8x128xf32> -> vector<8x128xf32>
    %78 = vector.broadcast %5 : vector<1x128xf32> to vector<8x128xf32>
    %79 = arith.addf %77, %78 : vector<8x128xf32>
    %c7_i32_43 = arith.constant 7 : i32
    %80 = arith.subi %c7_i32_43, %73 : i32
    %cst_44 = arith.constant dense<0.000000e+00> : vector<8x128xf32>
    %81 = tpu.matmul %68, %4, %cst_44 {dimension_numbers = #tpu.dot_dimension_numbers<[1], [0], [0], [1], [0, 0, 1, 1], [], []>} : vector<8x128xf32>, vector<128x128xf32>, vector<8x128xf32> -> vector<8x128xf32>
    %82 = arith.addf %81, %79 : vector<8x128xf32>
    %cst_45 = arith.constant 0.000000e+00 : f32
    %83 = vector.broadcast %cst_45 : f32 to vector<8x128xf32>
    %84 = arith.maximumf %82, %83 : vector<8x128xf32>
    %85 = arith.index_cast %80 : i32 to index
    %c0_46 = arith.constant 0 : index
    %c0_47 = arith.constant 0 : index
    %86 = vector.load %arg6[%85, %c0_46, %c0_47] : memref<8x8x128xf32, #tpu.memory_space<vmem>>, vector<1x8x128xf32>
    %87 = vector.shape_cast %86 : vector<1x8x128xf32> to vector<8x128xf32>
    %88 = vector.shape_cast %84 : vector<8x128xf32> to vector<1x8x128xf32>
    tpu.vector_store %arg6[%85, %c0_46, %c0_47], %88 {strides = array<i32>} : memref<8x8x128xf32, #tpu.memory_space<vmem>>, vector<1x8x128xf32>,
    %c5_i32 = arith.constant 5 : i32
    %89 = arith.addi %8, %c5_i32 : i32
    %90 = arith.index_cast %89 : i32 to index
    %c0_48 = arith.constant 0 : index
    %c0_49 = arith.constant 0 : index
    %91 = vector.load %arg2[%90, %c0_48, %c0_49] : memref<8x8x16xf32, #tpu.memory_space<vmem>>, vector<1x8x16xf32>
    %92 = vector.shape_cast %91 : vector<1x8x16xf32> to vector<8x16xf32>
    %cst_50 = arith.constant dense<0.000000e+00> : vector<8x128xf32>
    %93 = tpu.matmul %92, %3, %cst_50 {dimension_numbers = #tpu.dot_dimension_numbers<[1], [0], [0], [1], [0, 0, 1, 1], [], []>} : vector<8x16xf32>, vector<16x128xf32>, vector<8x128xf32> -> vector<8x128xf32>
    %94 = vector.broadcast %5 : vector<1x128xf32> to vector<8x128xf32>
    %95 = arith.addf %93, %94 : vector<8x128xf32>
    %c7_i32_51 = arith.constant 7 : i32
    %96 = arith.subi %c7_i32_51, %89 : i32
    %cst_52 = arith.constant dense<0.000000e+00> : vector<8x128xf32>
    %97 = tpu.matmul %84, %4, %cst_52 {dimension_numbers = #tpu.dot_dimension_numbers<[1], [0], [0], [1], [0, 0, 1, 1], [], []>} : vector<8x128xf32>, vector<128x128xf32>, vector<8x128xf32> -> vector<8x128xf32>
    %98 = arith.addf %97, %95 : vector<8x128xf32>
    %cst_53 = arith.constant 0.000000e+00 : f32
    %99 = vector.broadcast %cst_53 : f32 to vector<8x128xf32>
    %100 = arith.maximumf %98, %99 : vector<8x128xf32>
    %101 = arith.index_cast %96 : i32 to index
    %c0_54 = arith.constant 0 : index
    %c0_55 = arith.constant 0 : index
    %102 = vector.load %arg6[%101, %c0_54, %c0_55] : memref<8x8x128xf32, #tpu.memory_space<vmem>>, vector<1x8x128xf32>
    %103 = vector.shape_cast %102 : vector<1x8x128xf32> to vector<8x128xf32>
    %104 = vector.shape_cast %100 : vector<8x128xf32> to vector<1x8x128xf32>
    tpu.vector_store %arg6[%101, %c0_54, %c0_55], %104 {strides = array<i32>} : memref<8x8x128xf32, #tpu.memory_space<vmem>>, vector<1x8x128xf32>,
    %c6_i32 = arith.constant 6 : i32
    %105 = arith.addi %8, %c6_i32 : i32
    %106 = arith.index_cast %105 : i32 to index
    %c0_56 = arith.constant 0 : index
    %c0_57 = arith.constant 0 : index
    %107 = vector.load %arg2[%106, %c0_56, %c0_57] : memref<8x8x16xf32, #tpu.memory_space<vmem>>, vector<1x8x16xf32>
    %108 = vector.shape_cast %107 : vector<1x8x16xf32> to vector<8x16xf32>
    %cst_58 = arith.constant dense<0.000000e+00> : vector<8x128xf32>
    %109 = tpu.matmul %108, %3, %cst_58 {dimension_numbers = #tpu.dot_dimension_numbers<[1], [0], [0], [1], [0, 0, 1, 1], [], []>} : vector<8x16xf32>, vector<16x128xf32>, vector<8x128xf32> -> vector<8x128xf32>
    %110 = vector.broadcast %5 : vector<1x128xf32> to vector<8x128xf32>
    %111 = arith.addf %109, %110 : vector<8x128xf32>
    %c7_i32_59 = arith.constant 7 : i32
    %112 = arith.subi %c7_i32_59, %105 : i32
    %cst_60 = arith.constant dense<0.000000e+00> : vector<8x128xf32>
    %113 = tpu.matmul %100, %4, %cst_60 {dimension_numbers = #tpu.dot_dimension_numbers<[1], [0], [0], [1], [0, 0, 1, 1], [], []>} : vector<8x128xf32>, vector<128x128xf32>, vector<8x128xf32> -> vector<8x128xf32>
    %114 = arith.addf %113, %111 : vector<8x128xf32>
    %cst_61 = arith.constant 0.000000e+00 : f32
    %115 = vector.broadcast %cst_61 : f32 to vector<8x128xf32>
    %116 = arith.maximumf %114, %115 : vector<8x128xf32>
    %117 = arith.index_cast %112 : i32 to index
    %c0_62 = arith.constant 0 : index
    %c0_63 = arith.constant 0 : index
    %118 = vector.load %arg6[%117, %c0_62, %c0_63] : memref<8x8x128xf32, #tpu.memory_space<vmem>>, vector<1x8x128xf32>
    %119 = vector.shape_cast %118 : vector<1x8x128xf32> to vector<8x128xf32>
    %120 = vector.shape_cast %116 : vector<8x128xf32> to vector<1x8x128xf32>
    tpu.vector_store %arg6[%117, %c0_62, %c0_63], %120 {strides = array<i32>} : memref<8x8x128xf32, #tpu.memory_space<vmem>>, vector<1x8x128xf32>,
    %c7_i32_64 = arith.constant 7 : i32
    %121 = arith.addi %8, %c7_i32_64 : i32
    %122 = arith.index_cast %121 : i32 to index
    %c0_65 = arith.constant 0 : index
    %c0_66 = arith.constant 0 : index
    %123 = vector.load %arg2[%122, %c0_65, %c0_66] : memref<8x8x16xf32, #tpu.memory_space<vmem>>, vector<1x8x16xf32>
    %124 = vector.shape_cast %123 : vector<1x8x16xf32> to vector<8x16xf32>
    %cst_67 = arith.constant dense<0.000000e+00> : vector<8x128xf32>
    %125 = tpu.matmul %124, %3, %cst_67 {dimension_numbers = #tpu.dot_dimension_numbers<[1], [0], [0], [1], [0, 0, 1, 1], [], []>} : vector<8x16xf32>, vector<16x128xf32>, vector<8x128xf32> -> vector<8x128xf32>
    %126 = vector.broadcast %5 : vector<1x128xf32> to vector<8x128xf32>
    %127 = arith.addf %125, %126 : vector<8x128xf32>
    %c7_i32_68 = arith.constant 7 : i32
    %128 = arith.subi %c7_i32_68, %121 : i32
    %cst_69 = arith.constant dense<0.000000e+00> : vector<8x128xf32>
    %129 = tpu.matmul %116, %4, %cst_69 {dimension_numbers = #tpu.dot_dimension_numbers<[1], [0], [0], [1], [0, 0, 1, 1], [], []>} : vector<8x128xf32>, vector<128x128xf32>, vector<8x128xf32> -> vector<8x128xf32>
    %130 = arith.addf %129, %127 : vector<8x128xf32>
    %cst_70 = arith.constant 0.000000e+00 : f32
    %131 = vector.broadcast %cst_70 : f32 to vector<8x128xf32>
    %132 = arith.maximumf %130, %131 : vector<8x128xf32>
    %133 = arith.index_cast %128 : i32 to index
    %c0_71 = arith.constant 0 : index
    %c0_72 = arith.constant 0 : index
    %134 = vector.load %arg6[%133, %c0_71, %c0_72] : memref<8x8x128xf32, #tpu.memory_space<vmem>>, vector<1x8x128xf32>
    %135 = vector.shape_cast %134 : vector<1x8x128xf32> to vector<8x128xf32>
    %136 = vector.shape_cast %132 : vector<8x128xf32> to vector<1x8x128xf32>
    tpu.vector_store %arg6[%133, %c0_71, %c0_72], %136 {strides = array<i32>} : memref<8x8x128xf32, #tpu.memory_space<vmem>>, vector<1x8x128xf32>,
    %c1_i32_73 = arith.constant 1 : i32
    %c0_74 = arith.constant 0 : index
    %c0_75 = arith.constant 0 : index
    %137 = vector.load %arg7[%c0_74, %c0_75] : memref<8x128xf32, #tpu.memory_space<vmem>>, vector<8x128xf32>
    tpu.vector_store %arg7[%c0_74, %c0_75], %132 {strides = array<i32>} : memref<8x128xf32, #tpu.memory_space<vmem>>, vector<8x128xf32>,
    return
  }
  func.func @transform_0(%arg0: i32, %arg1: i32) -> (i32, i32, i32) {
    %c0_i32 = arith.constant 0 : i32
    %c0_i32_0 = arith.constant 0 : i32
    return %arg1, %arg0, %c0_i32 : i32, i32, i32
  }
  func.func @transform_1(%arg0: i32, %arg1: i32) -> (i32, i32) {
    %c0_i32 = arith.constant 0 : i32
    %c0_i32_0 = arith.constant 0 : i32
    %c0_i32_1 = arith.constant 0 : i32
    return %c0_i32, %c0_i32_0 : i32, i32
  }
  func.func @transform_2(%arg0: i32, %arg1: i32) -> (i32, i32) {
    %c0_i32 = arith.constant 0 : i32
    %c0_i32_0 = arith.constant 0 : i32
    %c0_i32_1 = arith.constant 0 : i32
    return %c0_i32, %c0_i32_0 : i32, i32
  }
  func.func @transform_3(%arg0: i32, %arg1: i32) -> (i32, i32) {
    %c0_i32 = arith.constant 0 : i32
    %c0_i32_0 = arith.constant 0 : i32
    %c0_i32_1 = arith.constant 0 : i32
    return %c0_i32, %c0_i32_0 : i32, i32
  }
  func.func @transform_4(%arg0: i32, %arg1: i32) -> (i32, i32, i32) {
    %c0_i32 = arith.constant 0 : i32
    %0 = arith.subi %c0_i32, %arg1 : i32
    %c0_i32_0 = arith.constant 0 : i32
    %c0_i32_1 = arith.constant 0 : i32
    return %0, %arg0, %c0_i32_0 : i32, i32, i32
  }
}

</mosaic_0001>

<llo_original>
// kernel: rnn_encoder_forward.1
$region0: #{rnn_encoder_forward.1}
  #allocation0 [shape = 'u32[]', space=smem, size = 0x4, offset = 0x4, fixed_abs, tag = 'smem constant byte address 0x4 - core index']
  #allocation1 [shape = 'u32[144,128]{1,0:T(1,128)}', space=vmem, size = 0x12000, scoped, tag = 'internal scratch']
  #allocation2 [shape = 'f32[8,128]{1,0:T(8,128)}', space=vmem, size = 0x1000, scoped, tag = 'scratch operand']
  %s0 = inlined_call_operand.vmem [shape: f32[8,8,16], index: 0, kind: input, shape index: {}]
  %s1 = inlined_call_operand.vmem [shape: f32[16,128], index: 1, kind: input, shape index: {}]
  %s2 = inlined_call_operand.vmem [shape: f32[128,128], index: 2, kind: input, shape index: {}]
  %s3 = inlined_call_operand.vmem [shape: f32[1,128], index: 3, kind: input, shape index: {}]
  %s4 = inlined_call_operand.vmem [shape: f32[8,8,128], index: 4, kind: output, shape index: {}]
  %s5 = sld [smem:[#allocation0]]
  $region30: #{rnn_encoder_forward.1} parent=0
    _
  %s7 = ssub.s32 1, %s5
  %s8 = scalar_select 0, %s7, %s5
  // Predicated region
  $region2: #{rnn_encoder_forward.1} parent=0 // pred_check
    _
  $region3: #{rnn_encoder_forward.1} parent=0 // pred_check_branch
    %10 = sbr.rel (0) target = $region5
  $region4: #{rnn_encoder_forward.1} parent=0 // pred_region
    _
  $region5: #{rnn_encoder_forward.1} parent=0 // pred_fallthru
    _
  // Predicated region
  $region6: #{rnn_encoder_forward.1} parent=0 // pred_check
    _
  $region7: #{rnn_encoder_forward.1} parent=0 // pred_check_branch
    %12 = sbr.rel (0) target = $region9
  $region8: #{rnn_encoder_forward.1} parent=0 // pred_region
    _
  $region9: #{rnn_encoder_forward.1} parent=0 // pred_fallthru
    _
  // Predicated region
  $region10: #{rnn_encoder_forward.1} parent=0 // pred_check
    _
  $region11: #{rnn_encoder_forward.1} parent=0 // pred_check_branch
    %14 = sbr.rel (0) target = $region13
  $region12: #{rnn_encoder_forward.1} parent=0 // pred_region
    _
  $region13: #{rnn_encoder_forward.1} parent=0 // pred_fallthru
    _
  // Predicated region
  $region14: #{rnn_encoder_forward.1} parent=0 // pred_check
    _
  $region15: #{rnn_encoder_forward.1} parent=0 // pred_check_branch
    %16 = sbr.rel (0) target = $region17
  $region16: #{rnn_encoder_forward.1} parent=0 // pred_region
    _
  $region17: #{rnn_encoder_forward.1} parent=0 // pred_fallthru
    _
  %s17 = ssub.s32 0, 0
  %s18 = smul.u32 8, %s17
  %p19 = scmp.lt.s32.totalorder %s18, 7
  %s20 = scalar_select %p19, %s18, 7
  %s21 = smul.addr %s20, 8
  %s22 = scalar_lea.vmem %s4, %s21
  %s23 = ssub.s32 0, 0
  %s24 = smul.u32 8, %s23
  %p25 = scmp.lt.s32.totalorder %s24, 7
  %s26 = scalar_select %p25, %s24, 7
  %s27 = smul.addr %s26, 8
  %s28 = scalar_lea.vmem %s4, %s27
  %s29 = ssub.s32 0, 0
  %s30 = smul.u32 8, %s29
  %p31 = scmp.eq.s32.totalorder 0, 0
  // Predicated region
  $region18: #{rnn_encoder_forward.1} parent=0 // pred_check
    %p32 = pneg %p31
  $region19: #{rnn_encoder_forward.1} parent=0 // pred_check_branch
    %34 = sbr.rel (%p32) target = $region21
  $region20: #{rnn_encoder_forward.1} parent=0 // pred_region
    %35 = vst [vmem:[#allocation2] sm:$0xff] 0.0
  $region21: #{rnn_encoder_forward.1} parent=0 // pred_fallthru
    _
  %v36 = vld [vmem:[%s1] sm:$0xff]
  %v37 = vld [vmem:[%s1 + $0x8] sm:$0xff]
  %v38 = vld [vmem:[%s2] sm:$0xff]
  %v39 = vld [vmem:[%s2 + $0x8] sm:$0xff]
  %v40 = vld [vmem:[%s2 + $0x10] sm:$0xff]
  %v41 = vld [vmem:[%s2 + $0x18] sm:$0xff]
  %v42 = vld [vmem:[%s2 + $0x20] sm:$0xff]
  %v43 = vld [vmem:[%s2 + $0x28] sm:$0xff]
  %v44 = vld [vmem:[%s2 + $0x30] sm:$0xff]
  %v45 = vld [vmem:[%s2 + $0x38] sm:$0xff]
  %v46 = vld [vmem:[%s2 + $0x40] sm:$0xff]
  %v47 = vld [vmem:[%s2 + $0x48] sm:$0xff]
  %v48 = vld [vmem:[%s2 + $0x50] sm:$0xff]
  %v49 = vld [vmem:[%s2 + $0x58] sm:$0xff]
  %v50 = vld [vmem:[%s2 + $0x60] sm:$0xff]
  %v51 = vld [vmem:[%s2 + $0x68] sm:$0xff]
  %v52 = vld [vmem:[%s2 + $0x70] sm:$0xff]
  %v53 = vld [vmem:[%s2 + $0x78] sm:$0xff]
  %v54 = vld [vmem:[%s3] sm:$0x1]
  %v55 = vld [vmem:[#allocation2] sm:$0xff]
  %s56 = smul.u32 0, 8
  %s57 = scalar_lea.vmem %s0, %s56
  %v58 = vld [vmem:[%s57] sm:$0xff]
  %v60 = vlaneseq
  %v61 = vshrl.u32 %v60, 7
  %v62 = vsub.s32 0, %v61
  %v63 = vrot.slane %v54, %v62
  %vm65 = vcmask 130048
  %v67 = vsel %vm65, %v58, 0
  %69 = vmatprep.subr.mxu0 0.0
  %70 = vmatpush1.msra.mxu0 %v36
  %71 = vmatprep.subr.mxu0 0.0
  %72 = vmatpush1.msra.mxu0 %v37
  %73 = vmatprep.subr.mxu0 0.0
  %74 = vmatpush1.msra.mxu0 0.0
  %75 = vmatprep.subr.mxu0 0.0
  %76 = vmatpush1.msra.mxu0 0.0
  %77 = vmatprep.subr.mxu0 0.0
  %78 = vmatpush1.msra.mxu0 0.0
  %79 = vmatprep.subr.mxu0 0.0
  %80 = vmatpush1.msra.mxu0 0.0
  %81 = vmatprep.subr.mxu0 0.0
  %82 = vmatpush1.msra.mxu0 0.0
  %83 = vmatprep.subr.mxu0 0.0
  %84 = vmatpush1.msra.mxu0 0.0
  %85 = vmatprep.subr.mxu0 0.0
  %86 = vmatpush1.msra.mxu0 0.0
  %87 = vmatprep.subr.mxu0 0.0
  %88 = vmatpush1.msra.mxu0 0.0
  %89 = vmatprep.subr.mxu0 0.0
  %90 = vmatpush1.msra.mxu0 0.0
  %91 = vmatprep.subr.mxu0 0.0
  %92 = vmatpush1.msra.mxu0 0.0
  %93 = vmatprep.subr.mxu0 0.0
  %94 = vmatpush1.msra.mxu0 0.0
  %95 = vmatprep.subr.mxu0 0.0
  %96 = vmatpush1.msra.mxu0 0.0
  %97 = vmatprep.subr.mxu0 0.0
  %98 = vmatpush1.msra.mxu0 0.0
  %99 = vmatprep.subr.mxu0 0.0
  %100 = vmatpush1.msra.mxu0 0.0
  %101 = vmatprep.subr.mxu0 0.0
  %102 = vmatpush1.msra.mxu0 0.0
  %103 = vmatprep.subr.mxu0 0.0
  %104 = vmatpush1.msra.mxu0 0.0
  %105 = vmatprep.subr.mxu0 0.0
  %106 = vmatpush1.msra.mxu0 0.0
  %107 = vmatprep.subr.mxu0 0.0
  %108 = vmatpush1.msra.mxu0 0.0
  %109 = vmatprep.subr.mxu0 0.0
  %110 = vmatpush1.msra.mxu0 0.0
  %111 = vmatprep.subr.mxu0 0.0
  %112 = vmatpush1.msra.mxu0 0.0
  %113 = vmatprep.subr.mxu0 0.0
  %114 = vmatpush1.msra.mxu0 0.0
  %115 = vmatprep.subr.mxu0 0.0
  %116 = vmatpush1.msra.mxu0 0.0
  %117 = vmatprep.subr.mxu0 0.0
  %118 = vmatpush1.msra.mxu0 0.0
  %119 = vmatprep.subr.mxu0 0.0
  %120 = vmatpush1.msra.mxu0 0.0
  %121 = vmatprep.subr.mxu0 0.0
  %122 = vmatpush1.msra.mxu0 0.0
  %123 = vmatprep.subr.mxu0 0.0
  %124 = vmatpush1.msra.mxu0 0.0
  %125 = vmatprep.subr.mxu0 0.0
  %126 = vmatpush1.msra.mxu0 0.0
  %127 = vmatprep.subr.mxu0 0.0
  %128 = vmatpush1.msra.mxu0 0.0
  %129 = vmatprep.subr.mxu0 0.0
  %130 = vmatpush1.msra.mxu0 0.0
  %131 = vmatprep.subr.mxu0 0.0
  %132 = vmatpush1.msra.mxu0 0.0
  %133 = vmatprep.mubr.f32.mxu0 0.0
  %134 = vmatmul.mubr.f32.gmra.mrb[0].mxu0 %v67
  %v135 = vpop.f32.mrb[0].mxu0
  %v136 = vadd.f32 %v63, %v135
  %v137 = vpop.f32.mrb[0].mxu0
  %138 = vdwg.mxu0
  %s139 = ssub.s32 7, 0
  %140 = vmatprep.subr.mxu0 0.0
  %141 = vmatpush1.msra.mxu0 %v38
  %142 = vmatprep.subr.mxu0 0.0
  %143 = vmatpush1.msra.mxu0 %v39
  %144 = vmatprep.subr.mxu0 0.0
  %145 = vmatpush1.msra.mxu0 %v40
  %146 = vmatprep.subr.mxu0 0.0
  %147 = vmatpush1.msra.mxu0 %v41
  %148 = vmatprep.subr.mxu0 0.0
  %149 = vmatpush1.msra.mxu0 %v42
  %150 = vmatprep.subr.mxu0 0.0
  %151 = vmatpush1.msra.mxu0 %v43
  %152 = vmatprep.subr.mxu0 0.0
  %153 = vmatpush1.msra.mxu0 %v44
  %154 = vmatprep.subr.mxu0 0.0
  %155 = vmatpush1.msra.mxu0 %v45
  %156 = vmatprep.subr.mxu0 0.0
  %157 = vmatpush1.msra.mxu0 %v46
  %158 = vmatprep.subr.mxu0 0.0
  %159 = vmatpush1.msra.mxu0 %v47
  %160 = vmatprep.subr.mxu0 0.0
  %161 = vmatpush1.msra.mxu0 %v48
  %162 = vmatprep.subr.mxu0 0.0
  %163 = vmatpush1.msra.mxu0 %v49
  %164 = vmatprep.subr.mxu0 0.0
  %165 = vmatpush1.msra.mxu0 %v50
  %166 = vmatprep.subr.mxu0 0.0
  %167 = vmatpush1.msra.mxu0 %v51
  %168 = vmatprep.subr.mxu0 0.0
  %169 = vmatpush1.msra.mxu0 %v52
  %170 = vmatprep.subr.mxu0 0.0
  %171 = vmatpush1.msra.mxu0 %v53
  %172 = vmatprep.subr.mxu0 0.0
  %173 = vmatpush1.msra.mxu0 0.0
  %174 = vmatprep.subr.mxu0 0.0
  %175 = vmatpush1.msra.mxu0 0.0
  %176 = vmatprep.subr.mxu0 0.0
  %177 = vmatpush1.msra.mxu0 0.0
  %178 = vmatprep.subr.mxu0 0.0
  %179 = vmatpush1.msra.mxu0 0.0
  %180 = vmatprep.subr.mxu0 0.0
  %181 = vmatpush1.msra.mxu0 0.0
  %182 = vmatprep.subr.mxu0 0.0
  %183 = vmatpush1.msra.mxu0 0.0
  %184 = vmatprep.subr.mxu0 0.0
  %185 = vmatpush1.msra.mxu0 0.0
  %186 = vmatprep.subr.mxu0 0.0
  %187 = vmatpush1.msra.mxu0 0.0
  %188 = vmatprep.subr.mxu0 0.0
  %189 = vmatpush1.msra.mxu0 0.0
  %190 = vmatprep.subr.mxu0 0.0
  %191 = vmatpush1.msra.mxu0 0.0
  %192 = vmatprep.subr.mxu0 0.0
  %193 = vmatpush1.msra.mxu0 0.0
  %194 = vmatprep.subr.mxu0 0.0
  %195 = vmatpush1.msra.mxu0 0.0
  %196 = vmatprep.subr.mxu0 0.0
  %197 = vmatpush1.msra.mxu0 0.0
  %198 = vmatprep.subr.mxu0 0.0
  %199 = vmatpush1.msra.mxu0 0.0
  %200 = vmatprep.subr.mxu0 0.0
  %201 = vmatpush1.msra.mxu0 0.0
  %202 = vmatprep.subr.mxu0 0.0
  %203 = vmatpush1.msra.mxu0 0.0
  %204 = vmatprep.mubr.f32.mxu0 0.0
  %205 = vmatmul.mubr.f32.gmra.mrb[0].mxu0 %v55
  %v206 = vpop.f32.mrb[0].mxu0
  %v207 = vadd.f32 %v136, %v206
  %v208 = vpop.f32.mrb[0].mxu0
  %209 = vdwg.mxu0
  %v210 = vmax.f32 %v207, 0.0
  %s211 = smul.u32 %s139, 8
  %s212 = scalar_lea.vmem %s28, %s211
  %213 = vst [vmem:[%s212] sm:$0xff] %v210
  %s214 = sadd.s32 0, 1
  %s215 = smul.u32 %s214, 8
  %s216 = scalar_lea.vmem %s0, %s215
  %v217 = vld [vmem:[%s216] sm:$0xff]
  %v219 = vsel %vm65, %v217, 0
  %221 = vmatprep.subr.mxu0 0.0
  %222 = vmatpush1.msra.mxu0 %v36
  %223 = vmatprep.subr.mxu0 0.0
  %224 = vmatpush1.msra.mxu0 %v37
  %225 = vmatprep.subr.mxu0 0.0
  %226 = vmatpush1.msra.mxu0 0.0
  %227 = vmatprep.subr.mxu0 0.0
  %228 = vmatpush1.msra.mxu0 0.0
  %229 = vmatprep.subr.mxu0 0.0
  %230 = vmatpush1.msra.mxu0 0.0
  %231 = vmatprep.subr.mxu0 0.0
  %232 = vmatpush1.msra.mxu0 0.0
  %233 = vmatprep.subr.mxu0 0.0
  %234 = vmatpush1.msra.mxu0 0.0
  %235 = vmatprep.subr.mxu0 0.0
  %236 = vmatpush1.msra.mxu0 0.0
  %237 = vmatprep.subr.mxu0 0.0
  %238 = vmatpush1.msra.mxu0 0.0
  %239 = vmatprep.subr.mxu0 0.0
  %240 = vmatpush1.msra.mxu0 0.0
  %241 = vmatprep.subr.mxu0 0.0
  %242 = vmatpush1.msra.mxu0 0.0
  %243 = vmatprep.subr.mxu0 0.0
  %244 = vmatpush1.msra.mxu0 0.0
  %245 = vmatprep.subr.mxu0 0.0
  %246 = vmatpush1.msra.mxu0 0.0
  %247 = vmatprep.subr.mxu0 0.0
  %248 = vmatpush1.msra.mxu0 0.0
  %249 = vmatprep.subr.mxu0 0.0
  %250 = vmatpush1.msra.mxu0 0.0
  %251 = vmatprep.subr.mxu0 0.0
  %252 = vmatpush1.msra.mxu0 0.0
  %253 = vmatprep.subr.mxu0 0.0
  %254 = vmatpush1.msra.mxu0 0.0
  %255 = vmatprep.subr.mxu0 0.0
  %256 = vmatpush1.msra.mxu0 0.0
  %257 = vmatprep.subr.mxu0 0.0
  %258 = vmatpush1.msra.mxu0 0.0
  %259 = vmatprep.subr.mxu0 0.0
  %260 = vmatpush1.msra.mxu0 0.0
  %261 = vmatprep.subr.mxu0 0.0
  %262 = vmatpush1.msra.mxu0 0.0
  %263 = vmatprep.subr.mxu0 0.0
  %264 = vmatpush1.msra.mxu0 0.0
  %265 = vmatprep.subr.mxu0 0.0
  %266 = vmatpush1.msra.mxu0 0.0
  %267 = vmatprep.subr.mxu0 0.0
  %268 = vmatpush1.msra.mxu0 0.0
  %269 = vmatprep.subr.mxu0 0.0
  %270 = vmatpush1.msra.mxu0 0.0
  %271 = vmatprep.subr.mxu0 0.0
  %272 = vmatpush1.msra.mxu0 0.0
  %273 = vmatprep.subr.mxu0 0.0
  %274 = vmatpush1.msra.mxu0 0.0
  %275 = vmatprep.subr.mxu0 0.0
  %276 = vmatpush1.msra.mxu0 0.0
  %277 = vmatprep.subr.mxu0 0.0
  %278 = vmatpush1.msra.mxu0 0.0
  %279 = vmatprep.subr.mxu0 0.0
  %280 = vmatpush1.msra.mxu0 0.0
  %281 = vmatprep.subr.mxu0 0.0
  %282 = vmatpush1.msra.mxu0 0.0
  %283 = vmatprep.subr.mxu0 0.0
  %284 = vmatpush1.msra.mxu0 0.0
  %285 = vmatprep.mubr.f32.mxu0 0.0
  %286 = vmatmul.mubr.f32.gmra.mrb[0].mxu0 %v219
  %v287 = vpop.f32.mrb[0].mxu0
  %v288 = vadd.f32 %v63, %v287
  %v289 = vpop.f32.mrb[0].mxu0
  %290 = vdwg.mxu0
  %s291 = ssub.s32 6, 0
  %292 = vmatprep.subr.mxu0 0.0
  %293 = vmatpush1.msra.mxu0 %v38
  %294 = vmatprep.subr.mxu0 0.0
  %295 = vmatpush1.msra.mxu0 %v39
  %296 = vmatprep.subr.mxu0 0.0
  %297 = vmatpush1.msra.mxu0 %v40
  %298 = vmatprep.subr.mxu0 0.0
  %299 = vmatpush1.msra.mxu0 %v41
  %300 = vmatprep.subr.mxu0 0.0
  %301 = vmatpush1.msra.mxu0 %v42
  %302 = vmatprep.subr.mxu0 0.0
  %303 = vmatpush1.msra.mxu0 %v43
  %304 = vmatprep.subr.mxu0 0.0
  %305 = vmatpush1.msra.mxu0 %v44
  %306 = vmatprep.subr.mxu0 0.0
  %307 = vmatpush1.msra.mxu0 %v45
  %308 = vmatprep.subr.mxu0 0.0
  %309 = vmatpush1.msra.mxu0 %v46
  %310 = vmatprep.subr.mxu0 0.0
  %311 = vmatpush1.msra.mxu0 %v47
  %312 = vmatprep.subr.mxu0 0.0
  %313 = vmatpush1.msra.mxu0 %v48
  %314 = vmatprep.subr.mxu0 0.0
  %315 = vmatpush1.msra.mxu0 %v49
  %316 = vmatprep.subr.mxu0 0.0
  %317 = vmatpush1.msra.mxu0 %v50
  %318 = vmatprep.subr.mxu0 0.0
  %319 = vmatpush1.msra.mxu0 %v51
  %320 = vmatprep.subr.mxu0 0.0
  %321 = vmatpush1.msra.mxu0 %v52
  %322 = vmatprep.subr.mxu0 0.0
  %323 = vmatpush1.msra.mxu0 %v53
  %324 = vmatprep.subr.mxu0 0.0
  %325 = vmatpush1.msra.mxu0 0.0
  %326 = vmatprep.subr.mxu0 0.0
  %327 = vmatpush1.msra.mxu0 0.0
  %328 = vmatprep.subr.mxu0 0.0
  %329 = vmatpush1.msra.mxu0 0.0
  %330 = vmatprep.subr.mxu0 0.0
  %331 = vmatpush1.msra.mxu0 0.0
  %332 = vmatprep.subr.mxu0 0.0
  %333 = vmatpush1.msra.mxu0 0.0
  %334 = vmatprep.subr.mxu0 0.0
  %335 = vmatpush1.msra.mxu0 0.0
  %336 = vmatprep.subr.mxu0 0.0
  %337 = vmatpush1.msra.mxu0 0.0
  %338 = vmatprep.subr.mxu0 0.0
  %339 = vmatpush1.msra.mxu0 0.0
  %340 = vmatprep.subr.mxu0 0.0
  %341 = vmatpush1.msra.mxu0 0.0
  %342 = vmatprep.subr.mxu0 0.0
  %343 = vmatpush1.msra.mxu0 0.0
  %344 = vmatprep.subr.mxu0 0.0
  %345 = vmatpush1.msra.mxu0 0.0
  %346 = vmatprep.subr.mxu0 0.0
  %347 = vmatpush1.msra.mxu0 0.0
  %348 = vmatprep.subr.mxu0 0.0
  %349 = vmatpush1.msra.mxu0 0.0
  %350 = vmatprep.subr.mxu0 0.0
  %351 = vmatpush1.msra.mxu0 0.0
  %352 = vmatprep.subr.mxu0 0.0
  %353 = vmatpush1.msra.mxu0 0.0
  %354 = vmatprep.subr.mxu0 0.0
  %355 = vmatpush1.msra.mxu0 0.0
  %356 = vmatprep.mubr.f32.mxu0 0.0
  %357 = vmatmul.mubr.f32.gmra.mrb[0].mxu0 %v210
  %v358 = vpop.f32.mrb[0].mxu0
  %v359 = vadd.f32 %v288, %v358
  %v360 = vpop.f32.mrb[0].mxu0
  %361 = vdwg.mxu0
  %v362 = vmax.f32 %v359, 0.0
  %s363 = smul.u32 %s291, 8
  %s364 = scalar_lea.vmem %s28, %s363
  %365 = vst [vmem:[%s364] sm:$0xff] %v362
  %s366 = sadd.s32 0, 2
  %s367 = smul.u32 %s366, 8
  %s368 = scalar_lea.vmem %s0, %s367
  %v369 = vld [vmem:[%s368] sm:$0xff]
  %v371 = vsel %vm65, %v369, 0
  %373 = vmatprep.subr.mxu0 0.0
  %374 = vmatpush1.msra.mxu0 %v36
  %375 = vmatprep.subr.mxu0 0.0
  %376 = vmatpush1.msra.mxu0 %v37
  %377 = vmatprep.subr.mxu0 0.0
  %378 = vmatpush1.msra.mxu0 0.0
  %379 = vmatprep.subr.mxu0 0.0
  %380 = vmatpush1.msra.mxu0 0.0
  %381 = vmatprep.subr.mxu0 0.0
  %382 = vmatpush1.msra.mxu0 0.0
  %383 = vmatprep.subr.mxu0 0.0
  %384 = vmatpush1.msra.mxu0 0.0
  %385 = vmatprep.subr.mxu0 0.0
  %386 = vmatpush1.msra.mxu0 0.0
  %387 = vmatprep.subr.mxu0 0.0
  %388 = vmatpush1.msra.mxu0 0.0
  %389 = vmatprep.subr.mxu0 0.0
  %390 = vmatpush1.msra.mxu0 0.0
  %391 = vmatprep.subr.mxu0 0.0
  %392 = vmatpush1.msra.mxu0 0.0
  %393 = vmatprep.subr.mxu0 0.0
  %394 = vmatpush1.msra.mxu0 0.0
  %395 = vmatprep.subr.mxu0 0.0
  %396 = vmatpush1.msra.mxu0 0.0
  %397 = vmatprep.subr.mxu0 0.0
  %398 = vmatpush1.msra.mxu0 0.0
  %399 = vmatprep.subr.mxu0 0.0
  %400 = vmatpush1.msra.mxu0 0.0
  %401 = vmatprep.subr.mxu0 0.0
  %402 = vmatpush1.msra.mxu0 0.0
  %403 = vmatprep.subr.mxu0 0.0
  %404 = vmatpush1.msra.mxu0 0.0
  %405 = vmatprep.subr.mxu0 0.0
  %406 = vmatpush1.msra.mxu0 0.0
  %407 = vmatprep.subr.mxu0 0.0
  %408 = vmatpush1.msra.mxu0 0.0
  %409 = vmatprep.subr.mxu0 0.0
  %410 = vmatpush1.msra.mxu0 0.0
  %411 = vmatprep.subr.mxu0 0.0
  %412 = vmatpush1.msra.mxu0 0.0
  %413 = vmatprep.subr.mxu0 0.0
  %414 = vmatpush1.msra.mxu0 0.0
  %415 = vmatprep.subr.mxu0 0.0
  %416 = vmatpush1.msra.mxu0 0.0
  %417 = vmatprep.subr.mxu0 0.0
  %418 = vmatpush1.msra.mxu0 0.0
  %419 = vmatprep.subr.mxu0 0.0
  %420 = vmatpush1.msra.mxu0 0.0
  %421 = vmatprep.subr.mxu0 0.0
  %422 = vmatpush1.msra.mxu0 0.0
  %423 = vmatprep.subr.mxu0 0.0
  %424 = vmatpush1.msra.mxu0 0.0
  %425 = vmatprep.subr.mxu0 0.0
  %426 = vmatpush1.msra.mxu0 0.0
  %427 = vmatprep.subr.mxu0 0.0
  %428 = vmatpush1.msra.mxu0 0.0
  %429 = vmatprep.subr.mxu0 0.0
  %430 = vmatpush1.msra.mxu0 0.0
  %431 = vmatprep.subr.mxu0 0.0
  %432 = vmatpush1.msra.mxu0 0.0
  %433 = vmatprep.subr.mxu0 0.0
  %434 = vmatpush1.msra.mxu0 0.0
  %435 = vmatprep.subr.mxu0 0.0
  %436 = vmatpush1.msra.mxu0 0.0
  %437 = vmatprep.mubr.f32.mxu0 0.0
  %438 = vmatmul.mubr.f32.gmra.mrb[0].mxu0 %v371
  %v439 = vpop.f32.mrb[0].mxu0
  %v440 = vadd.f32 %v63, %v439
  %v441 = vpop.f32.mrb[0].mxu0
  %442 = vdwg.mxu0
  %s443 = ssub.s32 5, 0
  %444 = vmatprep.subr.mxu0 0.0
  %445 = vmatpush1.msra.mxu0 %v38
  %446 = vmatprep.subr.mxu0 0.0
  %447 = vmatpush1.msra.mxu0 %v39
  %448 = vmatprep.subr.mxu0 0.0
  %449 = vmatpush1.msra.mxu0 %v40
  %450 = vmatprep.subr.mxu0 0.0
  %451 = vmatpush1.msra.mxu0 %v41
  %452 = vmatprep.subr.mxu0 0.0
  %453 = vmatpush1.msra.mxu0 %v42
  %454 = vmatprep.subr.mxu0 0.0
  %455 = vmatpush1.msra.mxu0 %v43
  %456 = vmatprep.subr.mxu0 0.0
  %457 = vmatpush1.msra.mxu0 %v44
  %458 = vmatprep.subr.mxu0 0.0
  %459 = vmatpush1.msra.mxu0 %v45
  %460 = vmatprep.subr.mxu0 0.0
  %461 = vmatpush1.msra.mxu0 %v46
  %462 = vmatprep.subr.mxu0 0.0
  %463 = vmatpush1.msra.mxu0 %v47
  %464 = vmatprep.subr.mxu0 0.0
  %465 = vmatpush1.msra.mxu0 %v48
  %466 = vmatprep.subr.mxu0 0.0
  %467 = vmatpush1.msra.mxu0 %v49
  %468 = vmatprep.subr.mxu0 0.0
  %469 = vmatpush1.msra.mxu0 %v50
  %470 = vmatprep.subr.mxu0 0.0
  %471 = vmatpush1.msra.mxu0 %v51
  %472 = vmatprep.subr.mxu0 0.0
  %473 = vmatpush1.msra.mxu0 %v52
  %474 = vmatprep.subr.mxu0 0.0
  %475 = vmatpush1.msra.mxu0 %v53
  %476 = vmatprep.subr.mxu0 0.0
  %477 = vmatpush1.msra.mxu0 0.0
  %478 = vmatprep.subr.mxu0 0.0
  %479 = vmatpush1.msra.mxu0 0.0
  %480 = vmatprep.subr.mxu0 0.0
  %481 = vmatpush1.msra.mxu0 0.0
  %482 = vmatprep.subr.mxu0 0.0
  %483 = vmatpush1.msra.mxu0 0.0
  %484 = vmatprep.subr.mxu0 0.0
  %485 = vmatpush1.msra.mxu0 0.0
  %486 = vmatprep.subr.mxu0 0.0
  %487 = vmatpush1.msra.mxu0 0.0
  %488 = vmatprep.subr.mxu0 0.0
  %489 = vmatpush1.msra.mxu0 0.0
  %490 = vmatprep.subr.mxu0 0.0
  %491 = vmatpush1.msra.mxu0 0.0
  %492 = vmatprep.subr.mxu0 0.0
  %493 = vmatpush1.msra.mxu0 0.0
  %494 = vmatprep.subr.mxu0 0.0
  %495 = vmatpush1.msra.mxu0 0.0
  %496 = vmatprep.subr.mxu0 0.0
  %497 = vmatpush1.msra.mxu0 0.0
  %498 = vmatprep.subr.mxu0 0.0
  %499 = vmatpush1.msra.mxu0 0.0
  %500 = vmatprep.subr.mxu0 0.0
  %501 = vmatpush1.msra.mxu0 0.0
  %502 = vmatprep.subr.mxu0 0.0
  %503 = vmatpush1.msra.mxu0 0.0
  %504 = vmatprep.subr.mxu0 0.0
  %505 = vmatpush1.msra.mxu0 0.0
  %506 = vmatprep.subr.mxu0 0.0
  %507 = vmatpush1.msra.mxu0 0.0
  %508 = vmatprep.mubr.f32.mxu0 0.0
  %509 = vmatmul.mubr.f32.gmra.mrb[0].mxu0 %v362
  %v510 = vpop.f32.mrb[0].mxu0
  %v511 = vadd.f32 %v440, %v510
  %v512 = vpop.f32.mrb[0].mxu0
  %513 = vdwg.mxu0
  %v514 = vmax.f32 %v511, 0.0
  %s515 = smul.u32 %s443, 8
  %s516 = scalar_lea.vmem %s28, %s515
  %517 = vst [vmem:[%s516] sm:$0xff] %v514
  %s518 = sadd.s32 0, 3
  %s519 = smul.u32 %s518, 8
  %s520 = scalar_lea.vmem %s0, %s519
  %v521 = vld [vmem:[%s520] sm:$0xff]
  %v523 = vsel %vm65, %v521, 0
  %525 = vmatprep.subr.mxu0 0.0
  %526 = vmatpush1.msra.mxu0 %v36
  %527 = vmatprep.subr.mxu0 0.0
  %528 = vmatpush1.msra.mxu0 %v37
  %529 = vmatprep.subr.mxu0 0.0
  %530 = vmatpush1.msra.mxu0 0.0
  %531 = vmatprep.subr.mxu0 0.0
  %532 = vmatpush1.msra.mxu0 0.0
  %533 = vmatprep.subr.mxu0 0.0
  %534 = vmatpush1.msra.mxu0 0.0
  %535 = vmatprep.subr.mxu0 0.0
  %536 = vmatpush1.msra.mxu0 0.0
  %537 = vmatprep.subr.mxu0 0.0
  %538 = vmatpush1.msra.mxu0 0.0
  %539 = vmatprep.subr.mxu0 0.0
  %540 = vmatpush1.msra.mxu0 0.0
  %541 = vmatprep.subr.mxu0 0.0
  %542 = vmatpush1.msra.mxu0 0.0
  %543 = vmatprep.subr.mxu0 0.0
  %544 = vmatpush1.msra.mxu0 0.0
  %545 = vmatprep.subr.mxu0 0.0
  %546 = vmatpush1.msra.mxu0 0.0
  %547 = vmatprep.subr.mxu0 0.0
  %548 = vmatpush1.msra.mxu0 0.0
  %549 = vmatprep.subr.mxu0 0.0
  %550 = vmatpush1.msra.mxu0 0.0
  %551 = vmatprep.subr.mxu0 0.0
  %552 = vmatpush1.msra.mxu0 0.0
  %553 = vmatprep.subr.mxu0 0.0
  %554 = vmatpush1.msra.mxu0 0.0
  %555 = vmatprep.subr.mxu0 0.0
  %556 = vmatpush1.msra.mxu0 0.0
  %557 = vmatprep.subr.mxu0 0.0
  %558 = vmatpush1.msra.mxu0 0.0
  %559 = vmatprep.subr.mxu0 0.0
  %560 = vmatpush1.msra.mxu0 0.0
  %561 = vmatprep.subr.mxu0 0.0
  %562 = vmatpush1.msra.mxu0 0.0
  %563 = vmatprep.subr.mxu0 0.0
  %564 = vmatpush1.msra.mxu0 0.0
  %565 = vmatprep.subr.mxu0 0.0
  %566 = vmatpush1.msra.mxu0 0.0
  %567 = vmatprep.subr.mxu0 0.0
  %568 = vmatpush1.msra.mxu0 0.0
  %569 = vmatprep.subr.mxu0 0.0
  %570 = vmatpush1.msra.mxu0 0.0
  %571 = vmatprep.subr.mxu0 0.0
  %572 = vmatpush1.msra.mxu0 0.0
  %573 = vmatprep.subr.mxu0 0.0
  %574 = vmatpush1.msra.mxu0 0.0
  %575 = vmatprep.subr.mxu0 0.0
  %576 = vmatpush1.msra.mxu0 0.0
  %577 = vmatprep.subr.mxu0 0.0
  %578 = vmatpush1.msra.mxu0 0.0
  %579 = vmatprep.subr.mxu0 0.0
  %580 = vmatpush1.msra.mxu0 0.0
  %581 = vmatprep.subr.mxu0 0.0
  %582 = vmatpush1.msra.mxu0 0.0
  %583 = vmatprep.subr.mxu0 0.0
  %584 = vmatpush1.msra.mxu0 0.0
  %585 = vmatprep.subr.mxu0 0.0
  %586 = vmatpush1.msra.mxu0 0.0
  %587 = vmatprep.subr.mxu0 0.0
  %588 = vmatpush1.msra.mxu0 0.0
  %589 = vmatprep.mubr.f32.mxu0 0.0
  %590 = vmatmul.mubr.f32.gmra.mrb[0].mxu0 %v523
  %v591 = vpop.f32.mrb[0].mxu0
  %v592 = vadd.f32 %v63, %v591
  %v593 = vpop.f32.mrb[0].mxu0
  %594 = vdwg.mxu0
  %s595 = ssub.s32 4, 0
  %596 = vmatprep.subr.mxu0 0.0
  %597 = vmatpush1.msra.mxu0 %v38
  %598 = vmatprep.subr.mxu0 0.0
  %599 = vmatpush1.msra.mxu0 %v39
  %600 = vmatprep.subr.mxu0 0.0
  %601 = vmatpush1.msra.mxu0 %v40
  %602 = vmatprep.subr.mxu0 0.0
  %603 = vmatpush1.msra.mxu0 %v41
  %604 = vmatprep.subr.mxu0 0.0
  %605 = vmatpush1.msra.mxu0 %v42
  %606 = vmatprep.subr.mxu0 0.0
  %607 = vmatpush1.msra.mxu0 %v43
  %608 = vmatprep.subr.mxu0 0.0
  %609 = vmatpush1.msra.mxu0 %v44
  %610 = vmatprep.subr.mxu0 0.0
  %611 = vmatpush1.msra.mxu0 %v45
  %612 = vmatprep.subr.mxu0 0.0
  %613 = vmatpush1.msra.mxu0 %v46
  %614 = vmatprep.subr.mxu0 0.0
  %615 = vmatpush1.msra.mxu0 %v47
  %616 = vmatprep.subr.mxu0 0.0
  %617 = vmatpush1.msra.mxu0 %v48
  %618 = vmatprep.subr.mxu0 0.0
  %619 = vmatpush1.msra.mxu0 %v49
  %620 = vmatprep.subr.mxu0 0.0
  %621 = vmatpush1.msra.mxu0 %v50
  %622 = vmatprep.subr.mxu0 0.0
  %623 = vmatpush1.msra.mxu0 %v51
  %624 = vmatprep.subr.mxu0 0.0
  %625 = vmatpush1.msra.mxu0 %v52
  %626 = vmatprep.subr.mxu0 0.0
  %627 = vmatpush1.msra.mxu0 %v53
  %628 = vmatprep.subr.mxu0 0.0
  %629 = vmatpush1.msra.mxu0 0.0
  %630 = vmatprep.subr.mxu0 0.0
  %631 = vmatpush1.msra.mxu0 0.0
  %632 = vmatprep.subr.mxu0 0.0
  %633 = vmatpush1.msra.mxu0 0.0
  %634 = vmatprep.subr.mxu0 0.0
  %635 = vmatpush1.msra.mxu0 0.0
  %636 = vmatprep.subr.mxu0 0.0
  %637 = vmatpush1.msra.mxu0 0.0
  %638 = vmatprep.subr.mxu0 0.0
  %639 = vmatpush1.msra.mxu0 0.0
  %640 = vmatprep.subr.mxu0 0.0
  %641 = vmatpush1.msra.mxu0 0.0
  %642 = vmatprep.subr.mxu0 0.0
  %643 = vmatpush1.msra.mxu0 0.0
  %644 = vmatprep.subr.mxu0 0.0
  %645 = vmatpush1.msra.mxu0 0.0
  %646 = vmatprep.subr.mxu0 0.0
  %647 = vmatpush1.msra.mxu0 0.0
  %648 = vmatprep.subr.mxu0 0.0
  %649 = vmatpush1.msra.mxu0 0.0
  %650 = vmatprep.subr.mxu0 0.0
  %651 = vmatpush1.msra.mxu0 0.0
  %652 = vmatprep.subr.mxu0 0.0
  %653 = vmatpush1.msra.mxu0 0.0
  %654 = vmatprep.subr.mxu0 0.0
  %655 = vmatpush1.msra.mxu0 0.0
  %656 = vmatprep.subr.mxu0 0.0
  %657 = vmatpush1.msra.mxu0 0.0
  %658 = vmatprep.subr.mxu0 0.0
  %659 = vmatpush1.msra.mxu0 0.0
  %660 = vmatprep.mubr.f32.mxu0 0.0
  %661 = vmatmul.mubr.f32.gmra.mrb[0].mxu0 %v514
  %v662 = vpop.f32.mrb[0].mxu0
  %v663 = vadd.f32 %v592, %v662
  %v664 = vpop.f32.mrb[0].mxu0
  %665 = vdwg.mxu0
  %v666 = vmax.f32 %v663, 0.0
  %s667 = smul.u32 %s595, 8
  %s668 = scalar_lea.vmem %s28, %s667
  %669 = vst [vmem:[%s668] sm:$0xff] %v666
  %s670 = sadd.s32 0, 4
  %s671 = smul.u32 %s670, 8
  %s672 = scalar_lea.vmem %s0, %s671
  %v673 = vld [vmem:[%s672] sm:$0xff]
  %v675 = vsel %vm65, %v673, 0
  %677 = vmatprep.subr.mxu0 0.0
  %678 = vmatpush1.msra.mxu0 %v36
  %679 = vmatprep.subr.mxu0 0.0
  %680 = vmatpush1.msra.mxu0 %v37
  %681 = vmatprep.subr.mxu0 0.0
  %682 = vmatpush1.msra.mxu0 0.0
  %683 = vmatprep.subr.mxu0 0.0
  %684 = vmatpush1.msra.mxu0 0.0
  %685 = vmatprep.subr.mxu0 0.0
  %686 = vmatpush1.msra.mxu0 0.0
  %687 = vmatprep.subr.mxu0 0.0
  %688 = vmatpush1.msra.mxu0 0.0
  %689 = vmatprep.subr.mxu0 0.0
  %690 = vmatpush1.msra.mxu0 0.0
  %691 = vmatprep.subr.mxu0 0.0
  %692 = vmatpush1.msra.mxu0 0.0
  %693 = vmatprep.subr.mxu0 0.0
  %694 = vmatpush1.msra.mxu0 0.0
  %695 = vmatprep.subr.mxu0 0.0
  %696 = vmatpush1.msra.mxu0 0.0
  %697 = vmatprep.subr.mxu0 0.0
  %698 = vmatpush1.msra.mxu0 0.0
  %699 = vmatprep.subr.mxu0 0.0
  %700 = vmatpush1.msra.mxu0 0.0
  %701 = vmatprep.subr.mxu0 0.0
  %702 = vmatpush1.msra.mxu0 0.0
  %703 = vmatprep.subr.mxu0 0.0
  %704 = vmatpush1.msra.mxu0 0.0
  %705 = vmatprep.subr.mxu0 0.0
  %706 = vmatpush1.msra.mxu0 0.0
  %707 = vmatprep.subr.mxu0 0.0
  %708 = vmatpush1.msra.mxu0 0.0
  %709 = vmatprep.subr.mxu0 0.0
  %710 = vmatpush1.msra.mxu0 0.0
  %711 = vmatprep.subr.mxu0 0.0
  %712 = vmatpush1.msra.mxu0 0.0
  %713 = vmatprep.subr.mxu0 0.0
  %714 = vmatpush1.msra.mxu0 0.0
  %715 = vmatprep.subr.mxu0 0.0
  %716 = vmatpush1.msra.mxu0 0.0
  %717 = vmatprep.subr.mxu0 0.0
  %718 = vmatpush1.msra.mxu0 0.0
  %719 = vmatprep.subr.mxu0 0.0
  %720 = vmatpush1.msra.mxu0 0.0
  %721 = vmatprep.subr.mxu0 0.0
  %722 = vmatpush1.msra.mxu0 0.0
  %723 = vmatprep.subr.mxu0 0.0
  %724 = vmatpush1.msra.mxu0 0.0
  %725 = vmatprep.subr.mxu0 0.0
  %726 = vmatpush1.msra.mxu0 0.0
  %727 = vmatprep.subr.mxu0 0.0
  %728 = vmatpush1.msra.mxu0 0.0
  %729 = vmatprep.subr.mxu0 0.0
  %730 = vmatpush1.msra.mxu0 0.0
  %731 = vmatprep.subr.mxu0 0.0
  %732 = vmatpush1.msra.mxu0 0.0
  %733 = vmatprep.subr.mxu0 0.0
  %734 = vmatpush1.msra.mxu0 0.0
  %735 = vmatprep.subr.mxu0 0.0
  %736 = vmatpush1.msra.mxu0 0.0
  %737 = vmatprep.subr.mxu0 0.0
  %738 = vmatpush1.msra.mxu0 0.0
  %739 = vmatprep.subr.mxu0 0.0
  %740 = vmatpush1.msra.mxu0 0.0
  %741 = vmatprep.mubr.f32.mxu0 0.0
  %742 = vmatmul.mubr.f32.gmra.mrb[0].mxu0 %v675
  %v743 = vpop.f32.mrb[0].mxu0
  %v744 = vadd.f32 %v63, %v743
  %v745 = vpop.f32.mrb[0].mxu0
  %746 = vdwg.mxu0
  %s747 = ssub.s32 3, 0
  %748 = vmatprep.subr.mxu0 0.0
  %749 = vmatpush1.msra.mxu0 %v38
  %750 = vmatprep.subr.mxu0 0.0
  %751 = vmatpush1.msra.mxu0 %v39
  %752 = vmatprep.subr.mxu0 0.0
  %753 = vmatpush1.msra.mxu0 %v40
  %754 = vmatprep.subr.mxu0 0.0
  %755 = vmatpush1.msra.mxu0 %v41
  %756 = vmatprep.subr.mxu0 0.0
  %757 = vmatpush1.msra.mxu0 %v42
  %758 = vmatprep.subr.mxu0 0.0
  %759 = vmatpush1.msra.mxu0 %v43
  %760 = vmatprep.subr.mxu0 0.0
  %761 = vmatpush1.msra.mxu0 %v44
  %762 = vmatprep.subr.mxu0 0.0
  %763 = vmatpush1.msra.mxu0 %v45
  %764 = vmatprep.subr.mxu0 0.0
  %765 = vmatpush1.msra.mxu0 %v46
  %766 = vmatprep.subr.mxu0 0.0
  %767 = vmatpush1.msra.mxu0 %v47
  %768 = vmatprep.subr.mxu0 0.0
  %769 = vmatpush1.msra.mxu0 %v48
  %770 = vmatprep.subr.mxu0 0.0
  %771 = vmatpush1.msra.mxu0 %v49
  %772 = vmatprep.subr.mxu0 0.0
  %773 = vmatpush1.msra.mxu0 %v50
  %774 = vmatprep.subr.mxu0 0.0
  %775 = vmatpush1.msra.mxu0 %v51
  %776 = vmatprep.subr.mxu0 0.0
  %777 = vmatpush1.msra.mxu0 %v52
  %778 = vmatprep.subr.mxu0 0.0
  %779 = vmatpush1.msra.mxu0 %v53
  %780 = vmatprep.subr.mxu0 0.0
  %781 = vmatpush1.msra.mxu0 0.0
  %782 = vmatprep.subr.mxu0 0.0
  %783 = vmatpush1.msra.mxu0 0.0
  %784 = vmatprep.subr.mxu0 0.0
  %785 = vmatpush1.msra.mxu0 0.0
  %786 = vmatprep.subr.mxu0 0.0
  %787 = vmatpush1.msra.mxu0 0.0
  %788 = vmatprep.subr.mxu0 0.0
  %789 = vmatpush1.msra.mxu0 0.0
  %790 = vmatprep.subr.mxu0 0.0
  %791 = vmatpush1.msra.mxu0 0.0
  %792 = vmatprep.subr.mxu0 0.0
  %793 = vmatpush1.msra.mxu0 0.0
  %794 = vmatprep.subr.mxu0 0.0
  %795 = vmatpush1.msra.mxu0 0.0
  %796 = vmatprep.subr.mxu0 0.0
  %797 = vmatpush1.msra.mxu0 0.0
  %798 = vmatprep.subr.mxu0 0.0
  %799 = vmatpush1.msra.mxu0 0.0
  %800 = vmatprep.subr.mxu0 0.0
  %801 = vmatpush1.msra.mxu0 0.0
  %802 = vmatprep.subr.mxu0 0.0
  %803 = vmatpush1.msra.mxu0 0.0
  %804 = vmatprep.subr.mxu0 0.0
  %805 = vmatpush1.msra.mxu0 0.0
  %806 = vmatprep.subr.mxu0 0.0
  %807 = vmatpush1.msra.mxu0 0.0
  %808 = vmatprep.subr.mxu0 0.0
  %809 = vmatpush1.msra.mxu0 0.0
  %810 = vmatprep.subr.mxu0 0.0
  %811 = vmatpush1.msra.mxu0 0.0
  %812 = vmatprep.mubr.f32.mxu0 0.0
  %813 = vmatmul.mubr.f32.gmra.mrb[0].mxu0 %v666
  %v814 = vpop.f32.mrb[0].mxu0
  %v815 = vadd.f32 %v744, %v814
  %v816 = vpop.f32.mrb[0].mxu0
  %817 = vdwg.mxu0
  %v818 = vmax.f32 %v815, 0.0
  %s819 = smul.u32 %s747, 8
  %s820 = scalar_lea.vmem %s28, %s819
  %821 = vst [vmem:[%s820] sm:$0xff] %v818
  %s822 = sadd.s32 0, 5
  %s823 = smul.u32 %s822, 8
  %s824 = scalar_lea.vmem %s0, %s823
  %v825 = vld [vmem:[%s824] sm:$0xff]
  %v827 = vsel %vm65, %v825, 0
  %829 = vmatprep.subr.mxu0 0.0
  %830 = vmatpush1.msra.mxu0 %v36
  %831 = vmatprep.subr.mxu0 0.0
  %832 = vmatpush1.msra.mxu0 %v37
  %833 = vmatprep.subr.mxu0 0.0
  %834 = vmatpush1.msra.mxu0 0.0
  %835 = vmatprep.subr.mxu0 0.0
  %836 = vmatpush1.msra.mxu0 0.0
  %837 = vmatprep.subr.mxu0 0.0
  %838 = vmatpush1.msra.mxu0 0.0
  %839 = vmatprep.subr.mxu0 0.0
  %840 = vmatpush1.msra.mxu0 0.0
  %841 = vmatprep.subr.mxu0 0.0
  %842 = vmatpush1.msra.mxu0 0.0
  %843 = vmatprep.subr.mxu0 0.0
  %844 = vmatpush1.msra.mxu0 0.0
  %845 = vmatprep.subr.mxu0 0.0
  %846 = vmatpush1.msra.mxu0 0.0
  %847 = vmatprep.subr.mxu0 0.0
  %848 = vmatpush1.msra.mxu0 0.0
  %849 = vmatprep.subr.mxu0 0.0
  %850 = vmatpush1.msra.mxu0 0.0
  %851 = vmatprep.subr.mxu0 0.0
  %852 = vmatpush1.msra.mxu0 0.0
  %853 = vmatprep.subr.mxu0 0.0
  %854 = vmatpush1.msra.mxu0 0.0
  %855 = vmatprep.subr.mxu0 0.0
  %856 = vmatpush1.msra.mxu0 0.0
  %857 = vmatprep.subr.mxu0 0.0
  %858 = vmatpush1.msra.mxu0 0.0
  %859 = vmatprep.subr.mxu0 0.0
  %860 = vmatpush1.msra.mxu0 0.0
  %861 = vmatprep.subr.mxu0 0.0
  %862 = vmatpush1.msra.mxu0 0.0
  %863 = vmatprep.subr.mxu0 0.0
  %864 = vmatpush1.msra.mxu0 0.0
  %865 = vmatprep.subr.mxu0 0.0
  %866 = vmatpush1.msra.mxu0 0.0
  %867 = vmatprep.subr.mxu0 0.0
  %868 = vmatpush1.msra.mxu0 0.0
  %869 = vmatprep.subr.mxu0 0.0
  %870 = vmatpush1.msra.mxu0 0.0
  %871 = vmatprep.subr.mxu0 0.0
  %872 = vmatpush1.msra.mxu0 0.0
  %873 = vmatprep.subr.mxu0 0.0
  %874 = vmatpush1.msra.mxu0 0.0
  %875 = vmatprep.subr.mxu0 0.0
  %876 = vmatpush1.msra.mxu0 0.0
  %877 = vmatprep.subr.mxu0 0.0
  %878 = vmatpush1.msra.mxu0 0.0
  %879 = vmatprep.subr.mxu0 0.0
  %880 = vmatpush1.msra.mxu0 0.0
  %881 = vmatprep.subr.mxu0 0.0
  %882 = vmatpush1.msra.mxu0 0.0
  %883 = vmatprep.subr.mxu0 0.0
  %884 = vmatpush1.msra.mxu0 0.0
  %885 = vmatprep.subr.mxu0 0.0
  %886 = vmatpush1.msra.mxu0 0.0
  %887 = vmatprep.subr.mxu0 0.0
  %888 = vmatpush1.msra.mxu0 0.0
  %889 = vmatprep.subr.mxu0 0.0
  %890 = vmatpush1.msra.mxu0 0.0
  %891 = vmatprep.subr.mxu0 0.0
  %892 = vmatpush1.msra.mxu0 0.0
  %893 = vmatprep.mubr.f32.mxu0 0.0
  %894 = vmatmul.mubr.f32.gmra.mrb[0].mxu0 %v827
  %v895 = vpop.f32.mrb[0].mxu0
  %v896 = vadd.f32 %v63, %v895
  %v897 = vpop.f32.mrb[0].mxu0
  %898 = vdwg.mxu0
  %s899 = ssub.s32 2, 0
  %900 = vmatprep.subr.mxu0 0.0
  %901 = vmatpush1.msra.mxu0 %v38
  %902 = vmatprep.subr.mxu0 0.0
  %903 = vmatpush1.msra.mxu0 %v39
  %904 = vmatprep.subr.mxu0 0.0
  %905 = vmatpush1.msra.mxu0 %v40
  %906 = vmatprep.subr.mxu0 0.0
  %907 = vmatpush1.msra.mxu0 %v41
  %908 = vmatprep.subr.mxu0 0.0
  %909 = vmatpush1.msra.mxu0 %v42
  %910 = vmatprep.subr.mxu0 0.0
  %911 = vmatpush1.msra.mxu0 %v43
  %912 = vmatprep.subr.mxu0 0.0
  %913 = vmatpush1.msra.mxu0 %v44
  %914 = vmatprep.subr.mxu0 0.0
  %915 = vmatpush1.msra.mxu0 %v45
  %916 = vmatprep.subr.mxu0 0.0
  %917 = vmatpush1.msra.mxu0 %v46
  %918 = vmatprep.subr.mxu0 0.0
  %919 = vmatpush1.msra.mxu0 %v47
  %920 = vmatprep.subr.mxu0 0.0
  %921 = vmatpush1.msra.mxu0 %v48
  %922 = vmatprep.subr.mxu0 0.0
  %923 = vmatpush1.msra.mxu0 %v49
  %924 = vmatprep.subr.mxu0 0.0
  %925 = vmatpush1.msra.mxu0 %v50
  %926 = vmatprep.subr.mxu0 0.0
  %927 = vmatpush1.msra.mxu0 %v51
  %928 = vmatprep.subr.mxu0 0.0
  %929 = vmatpush1.msra.mxu0 %v52
  %930 = vmatprep.subr.mxu0 0.0
  %931 = vmatpush1.msra.mxu0 %v53
  %932 = vmatprep.subr.mxu0 0.0
  %933 = vmatpush1.msra.mxu0 0.0
  %934 = vmatprep.subr.mxu0 0.0
  %935 = vmatpush1.msra.mxu0 0.0
  %936 = vmatprep.subr.mxu0 0.0
  %937 = vmatpush1.msra.mxu0 0.0
  %938 = vmatprep.subr.mxu0 0.0
  %939 = vmatpush1.msra.mxu0 0.0
  %940 = vmatprep.subr.mxu0 0.0
  %941 = vmatpush1.msra.mxu0 0.0
  %942 = vmatprep.subr.mxu0 0.0
  %943 = vmatpush1.msra.mxu0 0.0
  %944 = vmatprep.subr.mxu0 0.0
  %945 = vmatpush1.msra.mxu0 0.0
  %946 = vmatprep.subr.mxu0 0.0
  %947 = vmatpush1.msra.mxu0 0.0
  %948 = vmatprep.subr.mxu0 0.0
  %949 = vmatpush1.msra.mxu0 0.0
  %950 = vmatprep.subr.mxu0 0.0
  %951 = vmatpush1.msra.mxu0 0.0
  %952 = vmatprep.subr.mxu0 0.0
  %953 = vmatpush1.msra.mxu0 0.0
  %954 = vmatprep.subr.mxu0 0.0
  %955 = vmatpush1.msra.mxu0 0.0
  %956 = vmatprep.subr.mxu0 0.0
  %957 = vmatpush1.msra.mxu0 0.0
  %958 = vmatprep.subr.mxu0 0.0
  %959 = vmatpush1.msra.mxu0 0.0
  %960 = vmatprep.subr.mxu0 0.0
  %961 = vmatpush1.msra.mxu0 0.0
  %962 = vmatprep.subr.mxu0 0.0
  %963 = vmatpush1.msra.mxu0 0.0
  %964 = vmatprep.mubr.f32.mxu0 0.0
  %965 = vmatmul.mubr.f32.gmra.mrb[0].mxu0 %v818
  %v966 = vpop.f32.mrb[0].mxu0
  %v967 = vadd.f32 %v896, %v966
  %v968 = vpop.f32.mrb[0].mxu0
  %969 = vdwg.mxu0
  %v970 = vmax.f32 %v967, 0.0
  %s971 = smul.u32 %s899, 8
  %s972 = scalar_lea.vmem %s28, %s971
  %973 = vst [vmem:[%s972] sm:$0xff] %v970
  %s974 = sadd.s32 0, 6
  %s975 = smul.u32 %s974, 8
  %s976 = scalar_lea.vmem %s0, %s975
  %v977 = vld [vmem:[%s976] sm:$0xff]
  %v979 = vsel %vm65, %v977, 0
  %981 = vmatprep.subr.mxu0 0.0
  %982 = vmatpush1.msra.mxu0 %v36
  %983 = vmatprep.subr.mxu0 0.0
  %984 = vmatpush1.msra.mxu0 %v37
  %985 = vmatprep.subr.mxu0 0.0
  %986 = vmatpush1.msra.mxu0 0.0
  %987 = vmatprep.subr.mxu0 0.0
  %988 = vmatpush1.msra.mxu0 0.0
  %989 = vmatprep.subr.mxu0 0.0
  %990 = vmatpush1.msra.mxu0 0.0
  %991 = vmatprep.subr.mxu0 0.0
  %992 = vmatpush1.msra.mxu0 0.0
  %993 = vmatprep.subr.mxu0 0.0
  %994 = vmatpush1.msra.mxu0 0.0
  %995 = vmatprep.subr.mxu0 0.0
  %996 = vmatpush1.msra.mxu0 0.0
  %997 = vmatprep.subr.mxu0 0.0
  %998 = vmatpush1.msra.mxu0 0.0
  %999 = vmatprep.subr.mxu0 0.0
  %1000 = vmatpush1.msra.mxu0 0.0
  %1001 = vmatprep.subr.mxu0 0.0
  %1002 = vmatpush1.msra.mxu0 0.0
  %1003 = vmatprep.subr.mxu0 0.0
  %1004 = vmatpush1.msra.mxu0 0.0
  %1005 = vmatprep.subr.mxu0 0.0
  %1006 = vmatpush1.msra.mxu0 0.0
  %1007 = vmatprep.subr.mxu0 0.0
  %1008 = vmatpush1.msra.mxu0 0.0
  %1009 = vmatprep.subr.mxu0 0.0
  %1010 = vmatpush1.msra.mxu0 0.0
  %1011 = vmatprep.subr.mxu0 0.0
  %1012 = vmatpush1.msra.mxu0 0.0
  %1013 = vmatprep.subr.mxu0 0.0
  %1014 = vmatpush1.msra.mxu0 0.0
  %1015 = vmatprep.subr.mxu0 0.0
  %1016 = vmatpush1.msra.mxu0 0.0
  %1017 = vmatprep.subr.mxu0 0.0
  %1018 = vmatpush1.msra.mxu0 0.0
  %1019 = vmatprep.subr.mxu0 0.0
  %1020 = vmatpush1.msra.mxu0 0.0
  %1021 = vmatprep.subr.mxu0 0.0
  %1022 = vmatpush1.msra.mxu0 0.0
  %1023 = vmatprep.subr.mxu0 0.0
  %1024 = vmatpush1.msra.mxu0 0.0
  %1025 = vmatprep.subr.mxu0 0.0
  %1026 = vmatpush1.msra.mxu0 0.0
  %1027 = vmatprep.subr.mxu0 0.0
  %1028 = vmatpush1.msra.mxu0 0.0
  %1029 = vmatprep.subr.mxu0 0.0
  %1030 = vmatpush1.msra.mxu0 0.0
  %1031 = vmatprep.subr.mxu0 0.0
  %1032 = vmatpush1.msra.mxu0 0.0
  %1033 = vmatprep.subr.mxu0 0.0
  %1034 = vmatpush1.msra.mxu0 0.0
  %1035 = vmatprep.subr.mxu0 0.0
  %1036 = vmatpush1.msra.mxu0 0.0
  %1037 = vmatprep.subr.mxu0 0.0
  %1038 = vmatpush1.msra.mxu0 0.0
  %1039 = vmatprep.subr.mxu0 0.0
  %1040 = vmatpush1.msra.mxu0 0.0
  %1041 = vmatprep.subr.mxu0 0.0
  %1042 = vmatpush1.msra.mxu0 0.0
  %1043 = vmatprep.subr.mxu0 0.0
  %1044 = vmatpush1.msra.mxu0 0.0
  %1045 = vmatprep.mubr.f32.mxu0 0.0
  %1046 = vmatmul.mubr.f32.gmra.mrb[0].mxu0 %v979
  %v1047 = vpop.f32.mrb[0].mxu0
  %v1048 = vadd.f32 %v63, %v1047
  %v1049 = vpop.f32.mrb[0].mxu0
  %1050 = vdwg.mxu0
  %s1051 = ssub.s32 1, 0
  %1052 = vmatprep.subr.mxu0 0.0
  %1053 = vmatpush1.msra.mxu0 %v38
  %1054 = vmatprep.subr.mxu0 0.0
  %1055 = vmatpush1.msra.mxu0 %v39
  %1056 = vmatprep.subr.mxu0 0.0
  %1057 = vmatpush1.msra.mxu0 %v40
  %1058 = vmatprep.subr.mxu0 0.0
  %1059 = vmatpush1.msra.mxu0 %v41
  %1060 = vmatprep.subr.mxu0 0.0
  %1061 = vmatpush1.msra.mxu0 %v42
  %1062 = vmatprep.subr.mxu0 0.0
  %1063 = vmatpush1.msra.mxu0 %v43
  %1064 = vmatprep.subr.mxu0 0.0
  %1065 = vmatpush1.msra.mxu0 %v44
  %1066 = vmatprep.subr.mxu0 0.0
  %1067 = vmatpush1.msra.mxu0 %v45
  %1068 = vmatprep.subr.mxu0 0.0
  %1069 = vmatpush1.msra.mxu0 %v46
  %1070 = vmatprep.subr.mxu0 0.0
  %1071 = vmatpush1.msra.mxu0 %v47
  %1072 = vmatprep.subr.mxu0 0.0
  %1073 = vmatpush1.msra.mxu0 %v48
  %1074 = vmatprep.subr.mxu0 0.0
  %1075 = vmatpush1.msra.mxu0 %v49
  %1076 = vmatprep.subr.mxu0 0.0
  %1077 = vmatpush1.msra.mxu0 %v50
  %1078 = vmatprep.subr.mxu0 0.0
  %1079 = vmatpush1.msra.mxu0 %v51
  %1080 = vmatprep.subr.mxu0 0.0
  %1081 = vmatpush1.msra.mxu0 %v52
  %1082 = vmatprep.subr.mxu0 0.0
  %1083 = vmatpush1.msra.mxu0 %v53
  %1084 = vmatprep.subr.mxu0 0.0
  %1085 = vmatpush1.msra.mxu0 0.0
  %1086 = vmatprep.subr.mxu0 0.0
  %1087 = vmatpush1.msra.mxu0 0.0
  %1088 = vmatprep.subr.mxu0 0.0
  %1089 = vmatpush1.msra.mxu0 0.0
  %1090 = vmatprep.subr.mxu0 0.0
  %1091 = vmatpush1.msra.mxu0 0.0
  %1092 = vmatprep.subr.mxu0 0.0
  %1093 = vmatpush1.msra.mxu0 0.0
  %1094 = vmatprep.subr.mxu0 0.0
  %1095 = vmatpush1.msra.mxu0 0.0
  %1096 = vmatprep.subr.mxu0 0.0
  %1097 = vmatpush1.msra.mxu0 0.0
  %1098 = vmatprep.subr.mxu0 0.0
  %1099 = vmatpush1.msra.mxu0 0.0
  %1100 = vmatprep.subr.mxu0 0.0
  %1101 = vmatpush1.msra.mxu0 0.0
  %1102 = vmatprep.subr.mxu0 0.0
  %1103 = vmatpush1.msra.mxu0 0.0
  %1104 = vmatprep.subr.mxu0 0.0
  %1105 = vmatpush1.msra.mxu0 0.0
  %1106 = vmatprep.subr.mxu0 0.0
  %1107 = vmatpush1.msra.mxu0 0.0
  %1108 = vmatprep.subr.mxu0 0.0
  %1109 = vmatpush1.msra.mxu0 0.0
  %1110 = vmatprep.subr.mxu0 0.0
  %1111 = vmatpush1.msra.mxu0 0.0
  %1112 = vmatprep.subr.mxu0 0.0
  %1113 = vmatpush1.msra.mxu0 0.0
  %1114 = vmatprep.subr.mxu0 0.0
  %1115 = vmatpush1.msra.mxu0 0.0
  %1116 = vmatprep.mubr.f32.mxu0 0.0
  %1117 = vmatmul.mubr.f32.gmra.mrb[0].mxu0 %v970
  %v1118 = vpop.f32.mrb[0].mxu0
  %v1119 = vadd.f32 %v1048, %v1118
  %v1120 = vpop.f32.mrb[0].mxu0
  %1121 = vdwg.mxu0
  %v1122 = vmax.f32 %v1119, 0.0
  %s1123 = smul.u32 %s1051, 8
  %s1124 = scalar_lea.vmem %s28, %s1123
  %1125 = vst [vmem:[%s1124] sm:$0xff] %v1122
  %s1126 = sadd.s32 0, 7
  %s1127 = smul.u32 %s1126, 8
  %s1128 = scalar_lea.vmem %s0, %s1127
  %v1129 = vld [vmem:[%s1128] sm:$0xff]
  %v1131 = vsel %vm65, %v1129, 0
  %1133 = vmatprep.subr.mxu0 0.0
  %1134 = vmatpush1.msra.mxu0 %v36
  %1135 = vmatprep.subr.mxu0 0.0
  %1136 = vmatpush1.msra.mxu0 %v37
  %1137 = vmatprep.subr.mxu0 0.0
  %1138 = vmatpush1.msra.mxu0 0.0
  %1139 = vmatprep.subr.mxu0 0.0
  %1140 = vmatpush1.msra.mxu0 0.0
  %1141 = vmatprep.subr.mxu0 0.0
  %1142 = vmatpush1.msra.mxu0 0.0
  %1143 = vmatprep.subr.mxu0 0.0
  %1144 = vmatpush1.msra.mxu0 0.0
  %1145 = vmatprep.subr.mxu0 0.0
  %1146 = vmatpush1.msra.mxu0 0.0
  %1147 = vmatprep.subr.mxu0 0.0
  %1148 = vmatpush1.msra.mxu0 0.0
  %1149 = vmatprep.subr.mxu0 0.0
  %1150 = vmatpush1.msra.mxu0 0.0
  %1151 = vmatprep.subr.mxu0 0.0
  %1152 = vmatpush1.msra.mxu0 0.0
  %1153 = vmatprep.subr.mxu0 0.0
  %1154 = vmatpush1.msra.mxu0 0.0
  %1155 = vmatprep.subr.mxu0 0.0
  %1156 = vmatpush1.msra.mxu0 0.0
  %1157 = vmatprep.subr.mxu0 0.0
  %1158 = vmatpush1.msra.mxu0 0.0
  %1159 = vmatprep.subr.mxu0 0.0
  %1160 = vmatpush1.msra.mxu0 0.0
  %1161 = vmatprep.subr.mxu0 0.0
  %1162 = vmatpush1.msra.mxu0 0.0
  %1163 = vmatprep.subr.mxu0 0.0
  %1164 = vmatpush1.msra.mxu0 0.0
  %1165 = vmatprep.subr.mxu0 0.0
  %1166 = vmatpush1.msra.mxu0 0.0
  %1167 = vmatprep.subr.mxu0 0.0
  %1168 = vmatpush1.msra.mxu0 0.0
  %1169 = vmatprep.subr.mxu0 0.0
  %1170 = vmatpush1.msra.mxu0 0.0
  %1171 = vmatprep.subr.mxu0 0.0
  %1172 = vmatpush1.msra.mxu0 0.0
  %1173 = vmatprep.subr.mxu0 0.0
  %1174 = vmatpush1.msra.mxu0 0.0
  %1175 = vmatprep.subr.mxu0 0.0
  %1176 = vmatpush1.msra.mxu0 0.0
  %1177 = vmatprep.subr.mxu0 0.0
  %1178 = vmatpush1.msra.mxu0 0.0
  %1179 = vmatprep.subr.mxu0 0.0
  %1180 = vmatpush1.msra.mxu0 0.0
  %1181 = vmatprep.subr.mxu0 0.0
  %1182 = vmatpush1.msra.mxu0 0.0
  %1183 = vmatprep.subr.mxu0 0.0
  %1184 = vmatpush1.msra.mxu0 0.0
  %1185 = vmatprep.subr.mxu0 0.0
  %1186 = vmatpush1.msra.mxu0 0.0
  %1187 = vmatprep.subr.mxu0 0.0
  %1188 = vmatpush1.msra.mxu0 0.0
  %1189 = vmatprep.subr.mxu0 0.0
  %1190 = vmatpush1.msra.mxu0 0.0
  %1191 = vmatprep.subr.mxu0 0.0
  %1192 = vmatpush1.msra.mxu0 0.0
  %1193 = vmatprep.subr.mxu0 0.0
  %1194 = vmatpush1.msra.mxu0 0.0
  %1195 = vmatprep.subr.mxu0 0.0
  %1196 = vmatpush1.msra.mxu0 0.0
  %1197 = vmatprep.mubr.f32.mxu0 0.0
  %1198 = vmatmul.mubr.f32.gmra.mrb[0].mxu0 %v1131
  %v1199 = vpop.f32.mrb[0].mxu0
  %v1200 = vadd.f32 %v63, %v1199
  %v1201 = vpop.f32.mrb[0].mxu0
  %1202 = vdwg.mxu0
  %s1203 = ssub.s32 0, 0
  %1204 = vmatprep.subr.mxu0 0.0
  %1205 = vmatpush1.msra.mxu0 %v38
  %1206 = vmatprep.subr.mxu0 0.0
  %1207 = vmatpush1.msra.mxu0 %v39
  %1208 = vmatprep.subr.mxu0 0.0
  %1209 = vmatpush1.msra.mxu0 %v40
  %1210 = vmatprep.subr.mxu0 0.0
  %1211 = vmatpush1.msra.mxu0 %v41
  %1212 = vmatprep.subr.mxu0 0.0
  %1213 = vmatpush1.msra.mxu0 %v42
  %1214 = vmatprep.subr.mxu0 0.0
  %1215 = vmatpush1.msra.mxu0 %v43
  %1216 = vmatprep.subr.mxu0 0.0
  %1217 = vmatpush1.msra.mxu0 %v44
  %1218 = vmatprep.subr.mxu0 0.0
  %1219 = vmatpush1.msra.mxu0 %v45
  %1220 = vmatprep.subr.mxu0 0.0
  %1221 = vmatpush1.msra.mxu0 %v46
  %1222 = vmatprep.subr.mxu0 0.0
  %1223 = vmatpush1.msra.mxu0 %v47
  %1224 = vmatprep.subr.mxu0 0.0
  %1225 = vmatpush1.msra.mxu0 %v48
  %1226 = vmatprep.subr.mxu0 0.0
  %1227 = vmatpush1.msra.mxu0 %v49
  %1228 = vmatprep.subr.mxu0 0.0
  %1229 = vmatpush1.msra.mxu0 %v50
  %1230 = vmatprep.subr.mxu0 0.0
  %1231 = vmatpush1.msra.mxu0 %v51
  %1232 = vmatprep.subr.mxu0 0.0
  %1233 = vmatpush1.msra.mxu0 %v52
  %1234 = vmatprep.subr.mxu0 0.0
  %1235 = vmatpush1.msra.mxu0 %v53
  %1236 = vmatprep.subr.mxu0 0.0
  %1237 = vmatpush1.msra.mxu0 0.0
  %1238 = vmatprep.subr.mxu0 0.0
  %1239 = vmatpush1.msra.mxu0 0.0
  %1240 = vmatprep.subr.mxu0 0.0
  %1241 = vmatpush1.msra.mxu0 0.0
  %1242 = vmatprep.subr.mxu0 0.0
  %1243 = vmatpush1.msra.mxu0 0.0
  %1244 = vmatprep.subr.mxu0 0.0
  %1245 = vmatpush1.msra.mxu0 0.0
  %1246 = vmatprep.subr.mxu0 0.0
  %1247 = vmatpush1.msra.mxu0 0.0
  %1248 = vmatprep.subr.mxu0 0.0
  %1249 = vmatpush1.msra.mxu0 0.0
  %1250 = vmatprep.subr.mxu0 0.0
  %1251 = vmatpush1.msra.mxu0 0.0
  %1252 = vmatprep.subr.mxu0 0.0
  %1253 = vmatpush1.msra.mxu0 0.0
  %1254 = vmatprep.subr.mxu0 0.0
  %1255 = vmatpush1.msra.mxu0 0.0
  %1256 = vmatprep.subr.mxu0 0.0
  %1257 = vmatpush1.msra.mxu0 0.0
  %1258 = vmatprep.subr.mxu0 0.0
  %1259 = vmatpush1.msra.mxu0 0.0
  %1260 = vmatprep.subr.mxu0 0.0
  %1261 = vmatpush1.msra.mxu0 0.0
  %1262 = vmatprep.subr.mxu0 0.0
  %1263 = vmatpush1.msra.mxu0 0.0
  %1264 = vmatprep.subr.mxu0 0.0
  %1265 = vmatpush1.msra.mxu0 0.0
  %1266 = vmatprep.subr.mxu0 0.0
  %1267 = vmatpush1.msra.mxu0 0.0
  %1268 = vmatprep.mubr.f32.mxu0 0.0
  %1269 = vmatmul.mubr.f32.gmra.mrb[0].mxu0 %v1122
  %v1270 = vpop.f32.mrb[0].mxu0
  %v1271 = vadd.f32 %v1200, %v1270
  %v1272 = vpop.f32.mrb[0].mxu0
  %1273 = vdwg.mxu0
  %v1274 = vmax.f32 %v1271, 0.0
  %s1275 = smul.u32 %s1203, 8
  %s1276 = scalar_lea.vmem %s28, %s1275
  %1277 = vst [vmem:[%s1276] sm:$0xff] %v1274
  %1278 = vst [vmem:[#allocation2] sm:$0xff] %v1274
  %s1279 = ssub.s32 0, 0
  %s1280 = smul.u32 8, %s1279
  %p1281 = scmp.lt.s32.totalorder %s1280, 7
  %s1282 = scalar_select %p1281, %s1280, 7
  %s1283 = smul.addr %s1282, 8
  %s1284 = scalar_lea.vmem %s4, %s1283
  // Predicated region
  $region22: #{rnn_encoder_forward.1} parent=0 // pred_check
    _
  $region23: #{rnn_encoder_forward.1} parent=0 // pred_check_branch
    %1286 = sbr.rel (0) target = $region25
  $region24: #{rnn_encoder_forward.1} parent=0 // pred_region
    %s1287 = ssub.s32 0, 0
    %s1288 = smul.u32 8, %s1287
  $region25: #{rnn_encoder_forward.1} parent=0 // pred_fallthru
    _
  // Predicated region
  $region26: #{rnn_encoder_forward.1} parent=0 // pred_check
    _
  $region27: #{rnn_encoder_forward.1} parent=0 // pred_check_branch
    %1290 = sbr.rel (0) target = $region29
  $region28: #{rnn_encoder_forward.1} parent=0 // pred_region
    %s1291 = ssub.s32 0, 0
    %s1292 = smul.u32 8, %s1291
    %p1293 = scmp.lt.s32.totalorder %s1292, 7
    %s1294 = scalar_select %p1293, %s1292, 7
    %s1295 = smul.addr %s1294, 8
    %s1296 = scalar_lea.vmem %s4, %s1295
  $region29: #{rnn_encoder_forward.1} parent=0 // pred_fallthru
    _

</llo_original>
